<compile_context>
chip_gen: v6e
topology: v6e:2x2x1
jax: 0.10.0
libtpu: 0.0.40
codegen_flags: <defaults>
</compile_context>

<pallas_src>
import functools

import jax
import jax.numpy as jnp
from jax.experimental import pallas as pl
from jax.experimental.pallas import tpu as pltpu

EPS = 1e-5
LANE = 128


def _round_up(x, m):
    return ((x + m - 1) // m) * m


def _layernorm(h, gamma, beta):
    # One pass over h: var = E[h^2] - mu^2 (clamped against tiny negative
    # cancellation before adding eps).
    mu = jnp.mean(h, axis=-1, keepdims=True)
    var = jnp.maximum(jnp.mean(h * h, axis=-1, keepdims=True) - mu * mu, 0.0)
    return (h - mu) * jax.lax.rsqrt(var + EPS) * gamma + beta


def mlp_kernel(x_ref,
               w1_ref, b1_ref, g1_ref, be1_ref,
               w2_ref, b2_ref, g2_ref, be2_ref,
               w3_ref, b3_ref,
               o_ref):
    # x / W* arrive as bf16; every matmul accumulates in f32 on the MXU and
    # all post-matmul math (bias, LayerNorm, ReLU) stays in f32.
    x = x_ref[...]

    # Layer 1: Linear -> LayerNorm -> ReLU
    h = jnp.dot(x, w1_ref[...], preferred_element_type=jnp.float32) + b1_ref[...]
    h = jnp.maximum(_layernorm(h, g1_ref[...], be1_ref[...]), 0.0)

    # Layer 2: Linear -> LayerNorm -> ReLU
    h = jnp.dot(h.astype(jnp.bfloat16), w2_ref[...],
                preferred_element_type=jnp.float32) + b2_ref[...]
    h = jnp.maximum(_layernorm(h, g2_ref[...], be2_ref[...]), 0.0)

    # Layer 3: classifier head onto the lane-dense (128-padded) output slab.
    y = jnp.dot(h.astype(jnp.bfloat16), w3_ref[...],
                preferred_element_type=jnp.float32) + b3_ref[...]
    o_ref[...] = y.astype(o_ref.dtype)


@functools.partial(jax.jit, static_argnames=("block_b",))
def mymodel_forward(x, params, block_b=256):
    (w1, b1, g1, be1, w2, b2, g2, be2, w3, b3) = params
    B, in_dim = x.shape
    h_dim = w1.shape[1]
    out_dim = w3.shape[1]
    out_pad = _round_up(out_dim, LANE)   # lane-dense output stores

    # Clamp the tile to the (sublane-rounded) batch; keep it a multiple of 8.
    block_b = max(8, min(_round_up(block_b, 8), _round_up(B, 8)))
    grid = (pl.cdiv(B, block_b),)

    # bf16 MXU inputs (halved weight/activation DMA); bias/LN params stay f32.
    x_bf = x.astype(jnp.bfloat16)
    w1_bf = w1.astype(jnp.bfloat16)
    w2_bf = w2.astype(jnp.bfloat16)
    w3_bf = jnp.zeros((h_dim, out_pad), jnp.bfloat16).at[:, :out_dim].set(
        w3.astype(jnp.bfloat16))
    b3_p = jnp.zeros((1, out_pad), jnp.float32).at[:, :out_dim].set(b3)

    # Parameters are small: give every grid step the full parameter block
    # (constant index_map -> stays resident, no re-DMA per step).
    def param_spec(shape):
        return pl.BlockSpec(shape, lambda i: (0,) * len(shape))

    y = pl.pallas_call(
        mlp_kernel,
        out_shape=jax.ShapeDtypeStruct((B, out_pad), jnp.float32),
        grid_spec=pltpu.PrefetchScalarGridSpec(
            num_scalar_prefetch=0,
            grid=grid,
            in_specs=[
                pl.BlockSpec((block_b, in_dim), lambda i: (i, 0)),   # x tile
                param_spec((in_dim, h_dim)),    # w1
                param_spec((1, h_dim)),         # b1
                param_spec((1, h_dim)),         # ln1 gamma
                param_spec((1, h_dim)),         # ln1 beta
                param_spec((h_dim, h_dim)),     # w2
                param_spec((1, h_dim)),         # b2
                param_spec((1, h_dim)),         # ln2 gamma
                param_spec((1, h_dim)),         # ln2 beta
                param_spec((h_dim, out_pad)),   # w3 (128-lane padded)
                param_spec((1, out_pad)),       # b3 (128-lane padded)
            ],
            out_specs=pl.BlockSpec((block_b, out_pad), lambda i: (i, 0)),
        ),
        compiler_params=pltpu.CompilerParams(
            dimension_semantics=("parallel",),
            vmem_limit_bytes=48 * 1024 * 1024),
    )(x_bf, w1_bf, b1, g1, be1, w2_bf, b2, g2, be2, w3_bf, b3_p)

    return y[:, :out_dim]


def init_params(key, in_dim, n_hidden1, out_dim):
    """Deterministic init mimicking nn.Linear default (uniform(-1/sqrt(fan_in)))."""
    ks = jax.random.split(key, 6)

    def linear(kw, kb, fan_in, fan_out):
        bound = 1.0 / jnp.sqrt(fan_in)
        w = jax.random.uniform(kw, (fan_in, fan_out), jnp.float32, -bound, bound)
        b = jax.random.uniform(kb, (1, fan_out), jnp.float32, -bound, bound)
        return w, b

    w1, b1 = linear(ks[0], ks[1], in_dim, n_hidden1)
    w2, b2 = linear(ks[2], ks[3], n_hidden1, n_hidden1)
    w3, b3 = linear(ks[4], ks[5], n_hidden1, out_dim)
    # LayerNorm default init: gamma=1, beta=0
    g1 = jnp.ones((1, n_hidden1), jnp.float32)
    be1 = jnp.zeros((1, n_hidden1), jnp.float32)
    g2 = jnp.ones((1, n_hidden1), jnp.float32)
    be2 = jnp.zeros((1, n_hidden1), jnp.float32)
    return (w1, b1, g1, be1, w2, b2, g2, be2, w3, b3)


def reference_forward(x, params, matmul_dtype=jnp.float32):
    """Pure-JAX reference. matmul_dtype=bf16 mirrors the kernel's MXU inputs."""
    (w1, b1, g1, be1, w2, b2, g2, be2, w3, b3) = params

    def ln(h, g, b):
        mu = h.mean(-1, keepdims=True)
        var = ((h - mu) ** 2).mean(-1, keepdims=True)
        return (h - mu) * jax.lax.rsqrt(var + EPS) * g + b

    def dot(a, w):
        return jnp.dot(a.astype(matmul_dtype), w.astype(matmul_dtype),
                       preferred_element_type=jnp.float32)

    h = jax.nn.relu(ln(dot(x, w1) + b1, g1, be1))
    h = jax.nn.relu(ln(dot(h, w2) + b2, g2, be2))
    return dot(h, w3) + b3


if __name__ == "__main__":
    B, in_dim, n_hidden1, out_dim = 256, 32, 64, 16

    key = jax.random.PRNGKey(0)
    kx, kp = jax.random.split(key)
    x = jax.random.normal(kx, (B, in_dim), jnp.float32)
    params = init_params(kp, in_dim, n_hidden1, out_dim)

    # block_b=128 -> grid=(2,) so the "parallel" batch axis can shard across
    # both TensorCores on v7x; raise to 256-1024 for larger batches.
    out = mymodel_forward(x, params, block_b=128)
    out = jax.block_until_ready(out)
    assert out.shape == (B, out_dim)

    # Tight check vs a reference using the same bf16 matmul inputs / f32 accum.
    ref_bf16 = reference_forward(x, params, matmul_dtype=jnp.bfloat16)
    assert jnp.allclose(out, ref_bf16, atol=2e-3, rtol=2e-3), \
        "mismatch vs bf16-matched reference"

    # Sanity check vs the pure-f32 PyTorch-equivalent math (bf16 quantization
    # noise only).
    ref_f32 = reference_forward(x, params, matmul_dtype=jnp.float32)
    assert jnp.allclose(out, ref_f32, atol=5e-2, rtol=5e-2), \
        "mismatch vs f32 reference"

    print("KERNEL_OK")
</pallas_src>

<mosaic_0001>
module attributes {stable_mosaic.version = 11 : i64} {
  func.func @mlp_kernel(%arg0: i32, %arg1: memref<128x32xbf16, #tpu.memory_space<vmem>>, %arg2: memref<32x64xbf16, #tpu.memory_space<vmem>>, %arg3: memref<1x64xf32, #tpu.memory_space<vmem>>, %arg4: memref<1x64xf32, #tpu.memory_space<vmem>>, %arg5: memref<1x64xf32, #tpu.memory_space<vmem>>, %arg6: memref<64x64xbf16, #tpu.memory_space<vmem>>, %arg7: memref<1x64xf32, #tpu.memory_space<vmem>>, %arg8: memref<1x64xf32, #tpu.memory_space<vmem>>, %arg9: memref<1x64xf32, #tpu.memory_space<vmem>>, %arg10: memref<64x128xbf16, #tpu.memory_space<vmem>>, %arg11: memref<1x128xf32, #tpu.memory_space<vmem>>, %arg12: memref<128x128xf32, #tpu.memory_space<vmem>>) attributes {dimension_semantics = [#tpu.dimension_semantics<parallel>], iteration_bounds = array<i64: 2>, scalar_prefetch = 0 : i64, scratch_operands = 0 : i64, tpu.core_type = #tpu.core_type<tc>, window_params = [{transform_indices = @transform_0, window_bounds = array<i64: 128, 32>}, {pipeline_mode = #tpu.pipeline_mode<synchronous>, transform_indices = @transform_1, window_bounds = array<i64: 32, 64>}, {pipeline_mode = #tpu.pipeline_mode<synchronous>, transform_indices = @transform_2, window_bounds = array<i64: 1, 64>}, {pipeline_mode = #tpu.pipeline_mode<synchronous>, transform_indices = @transform_3, window_bounds = array<i64: 1, 64>}, {pipeline_mode = #tpu.pipeline_mode<synchronous>, transform_indices = @transform_4, window_bounds = array<i64: 1, 64>}, {pipeline_mode = #tpu.pipeline_mode<synchronous>, transform_indices = @transform_5, window_bounds = array<i64: 64, 64>}, {pipeline_mode = #tpu.pipeline_mode<synchronous>, transform_indices = @transform_6, window_bounds = array<i64: 1, 64>}, {pipeline_mode = #tpu.pipeline_mode<synchronous>, transform_indices = @transform_7, window_bounds = array<i64: 1, 64>}, {pipeline_mode = #tpu.pipeline_mode<synchronous>, transform_indices = @transform_8, window_bounds = array<i64: 1, 64>}, {pipeline_mode = #tpu.pipeline_mode<synchronous>, transform_indices = @transform_9, window_bounds = array<i64: 64, 128>}, {pipeline_mode = #tpu.pipeline_mode<synchronous>, transform_indices = @transform_10, window_bounds = array<i64: 1, 128>}, {transform_indices = @transform_11, window_bounds = array<i64: 128, 128>}]} {
    %c0 = arith.constant 0 : index
    %c0_0 = arith.constant 0 : index
    %0 = vector.load %arg1[%c0, %c0_0] : memref<128x32xbf16, #tpu.memory_space<vmem>>, vector<128x32xbf16>
    %c0_1 = arith.constant 0 : index
    %c0_2 = arith.constant 0 : index
    %1 = vector.load %arg2[%c0_1, %c0_2] : memref<32x64xbf16, #tpu.memory_space<vmem>>, vector<32x64xbf16>
    %cst = arith.constant dense<0.000000e+00> : vector<128x64xf32>
    %2 = tpu.matmul %0, %1, %cst {dimension_numbers = #tpu.dot_dimension_numbers<[1], [0], [0], [1], [0, 0, 1, 1], [], []>} : vector<128x32xbf16>, vector<32x64xbf16>, vector<128x64xf32> -> vector<128x64xf32>
    %c0_3 = arith.constant 0 : index
    %c0_4 = arith.constant 0 : index
    %3 = vector.load %arg3[%c0_3, %c0_4] : memref<1x64xf32, #tpu.memory_space<vmem>>, vector<1x64xf32>
    %4 = vector.broadcast %3 : vector<1x64xf32> to vector<128x64xf32>
    %5 = arith.addf %2, %4 : vector<128x64xf32>
    %c0_5 = arith.constant 0 : index
    %c0_6 = arith.constant 0 : index
    %6 = vector.load %arg4[%c0_5, %c0_6] : memref<1x64xf32, #tpu.memory_space<vmem>>, vector<1x64xf32>
    %c0_7 = arith.constant 0 : index
    %c0_8 = arith.constant 0 : index
    %7 = vector.load %arg5[%c0_7, %c0_8] : memref<1x64xf32, #tpu.memory_space<vmem>>, vector<1x64xf32>
    %cst_9 = arith.constant dense<0.000000e+00> : vector<128xf32>
    %8 = vector.multi_reduction <add>, %5, %cst_9 [1] : vector<128x64xf32> to vector<128xf32>
    %9 = vector.shape_cast %8 : vector<128xf32> to vector<128x1xf32>
    %cst_10 = arith.constant 6.400000e+01 : f32
    %10 = vector.broadcast %cst_10 : f32 to vector<128x1xf32>
    %11 = arith.divf %9, %10 : vector<128x1xf32>
    %12 = arith.mulf %5, %5 : vector<128x64xf32>
    %cst_11 = arith.constant dense<0.000000e+00> : vector<128xf32>
    %13 = vector.multi_reduction <add>, %12, %cst_11 [1] : vector<128x64xf32> to vector<128xf32>
    %14 = vector.shape_cast %13 : vector<128xf32> to vector<128x1xf32>
    %cst_12 = arith.constant 6.400000e+01 : f32
    %15 = vector.broadcast %cst_12 : f32 to vector<128x1xf32>
    %16 = arith.divf %14, %15 : vector<128x1xf32>
    %17 = arith.mulf %11, %11 : vector<128x1xf32>
    %18 = arith.subf %16, %17 : vector<128x1xf32>
    %cst_13 = arith.constant 0.000000e+00 : f32
    %19 = vector.broadcast %cst_13 : f32 to vector<128x1xf32>
    %20 = arith.maximumf %18, %19 : vector<128x1xf32>
    %21 = vector.broadcast %11 : vector<128x1xf32> to vector<128x64xf32>
    %22 = arith.subf %5, %21 : vector<128x64xf32>
    %cst_14 = arith.constant 9.99999974E-6 : f32
    %23 = vector.broadcast %cst_14 : f32 to vector<128x1xf32>
    %24 = arith.addf %20, %23 : vector<128x1xf32>
    %25 = math.rsqrt %24 : vector<128x1xf32>
    %26 = vector.broadcast %25 : vector<128x1xf32> to vector<128x64xf32>
    %27 = arith.mulf %22, %26 : vector<128x64xf32>
    %28 = vector.broadcast %6 : vector<1x64xf32> to vector<128x64xf32>
    %29 = arith.mulf %27, %28 : vector<128x64xf32>
    %30 = vector.broadcast %7 : vector<1x64xf32> to vector<128x64xf32>
    %31 = arith.addf %29, %30 : vector<128x64xf32>
    %cst_15 = arith.constant 0.000000e+00 : f32
    %32 = vector.broadcast %cst_15 : f32 to vector<128x64xf32>
    %33 = arith.maximumf %31, %32 : vector<128x64xf32>
    %34 = arith.truncf %33 : vector<128x64xf32> to vector<128x64xbf16>
    %c0_16 = arith.constant 0 : index
    %c0_17 = arith.constant 0 : index
    %35 = vector.load %arg6[%c0_16, %c0_17] : memref<64x64xbf16, #tpu.memory_space<vmem>>, vector<64x64xbf16>
    %cst_18 = arith.constant dense<0.000000e+00> : vector<128x64xf32>
    %36 = tpu.matmul %34, %35, %cst_18 {dimension_numbers = #tpu.dot_dimension_numbers<[1], [0], [0], [1], [0, 0, 1, 1], [], []>} : vector<128x64xbf16>, vector<64x64xbf16>, vector<128x64xf32> -> vector<128x64xf32>
    %c0_19 = arith.constant 0 : index
    %c0_20 = arith.constant 0 : index
    %37 = vector.load %arg7[%c0_19, %c0_20] : memref<1x64xf32, #tpu.memory_space<vmem>>, vector<1x64xf32>
    %38 = vector.broadcast %37 : vector<1x64xf32> to vector<128x64xf32>
    %39 = arith.addf %36, %38 : vector<128x64xf32>
    %c0_21 = arith.constant 0 : index
    %c0_22 = arith.constant 0 : index
    %40 = vector.load %arg8[%c0_21, %c0_22] : memref<1x64xf32, #tpu.memory_space<vmem>>, vector<1x64xf32>
    %c0_23 = arith.constant 0 : index
    %c0_24 = arith.constant 0 : index
    %41 = vector.load %arg9[%c0_23, %c0_24] : memref<1x64xf32, #tpu.memory_space<vmem>>, vector<1x64xf32>
    %cst_25 = arith.constant dense<0.000000e+00> : vector<128xf32>
    %42 = vector.multi_reduction <add>, %39, %cst_25 [1] : vector<128x64xf32> to vector<128xf32>
    %43 = vector.shape_cast %42 : vector<128xf32> to vector<128x1xf32>
    %cst_26 = arith.constant 6.400000e+01 : f32
    %44 = vector.broadcast %cst_26 : f32 to vector<128x1xf32>
    %45 = arith.divf %43, %44 : vector<128x1xf32>
    %46 = arith.mulf %39, %39 : vector<128x64xf32>
    %cst_27 = arith.constant dense<0.000000e+00> : vector<128xf32>
    %47 = vector.multi_reduction <add>, %46, %cst_27 [1] : vector<128x64xf32> to vector<128xf32>
    %48 = vector.shape_cast %47 : vector<128xf32> to vector<128x1xf32>
    %cst_28 = arith.constant 6.400000e+01 : f32
    %49 = vector.broadcast %cst_28 : f32 to vector<128x1xf32>
    %50 = arith.divf %48, %49 : vector<128x1xf32>
    %51 = arith.mulf %45, %45 : vector<128x1xf32>
    %52 = arith.subf %50, %51 : vector<128x1xf32>
    %cst_29 = arith.constant 0.000000e+00 : f32
    %53 = vector.broadcast %cst_29 : f32 to vector<128x1xf32>
    %54 = arith.maximumf %52, %53 : vector<128x1xf32>
    %55 = vector.broadcast %45 : vector<128x1xf32> to vector<128x64xf32>
    %56 = arith.subf %39, %55 : vector<128x64xf32>
    %cst_30 = arith.constant 9.99999974E-6 : f32
    %57 = vector.broadcast %cst_30 : f32 to vector<128x1xf32>
    %58 = arith.addf %54, %57 : vector<128x1xf32>
    %59 = math.rsqrt %58 : vector<128x1xf32>
    %60 = vector.broadcast %59 : vector<128x1xf32> to vector<128x64xf32>
    %61 = arith.mulf %56, %60 : vector<128x64xf32>
    %62 = vector.broadcast %40 : vector<1x64xf32> to vector<128x64xf32>
    %63 = arith.mulf %61, %62 : vector<128x64xf32>
    %64 = vector.broadcast %41 : vector<1x64xf32> to vector<128x64xf32>
    %65 = arith.addf %63, %64 : vector<128x64xf32>
    %cst_31 = arith.constant 0.000000e+00 : f32
    %66 = vector.broadcast %cst_31 : f32 to vector<128x64xf32>
    %67 = arith.maximumf %65, %66 : vector<128x64xf32>
    %68 = arith.truncf %67 : vector<128x64xf32> to vector<128x64xbf16>
    %c0_32 = arith.constant 0 : index
    %c0_33 = arith.constant 0 : index
    %69 = vector.load %arg10[%c0_32, %c0_33] : memref<64x128xbf16, #tpu.memory_space<vmem>>, vector<64x128xbf16>
    %cst_34 = arith.constant dense<0.000000e+00> : vector<128x128xf32>
    %70 = tpu.matmul %68, %69, %cst_34 {dimension_numbers = #tpu.dot_dimension_numbers<[1], [0], [0], [1], [0, 0, 1, 1], [], []>} : vector<128x64xbf16>, vector<64x128xbf16>, vector<128x128xf32> -> vector<128x128xf32>
    %c0_35 = arith.constant 0 : index
    %c0_36 = arith.constant 0 : index
    %71 = vector.load %arg11[%c0_35, %c0_36] : memref<1x128xf32, #tpu.memory_space<vmem>>, vector<1x128xf32>
    %72 = vector.broadcast %71 : vector<1x128xf32> to vector<128x128xf32>
    %73 = arith.addf %70, %72 : vector<128x128xf32>
    %c0_37 = arith.constant 0 : index
    %c0_38 = arith.constant 0 : index
    %74 = vector.load %arg12[%c0_37, %c0_38] : memref<128x128xf32, #tpu.memory_space<vmem>>, vector<128x128xf32>
    tpu.vector_store %arg12[%c0_37, %c0_38], %73 {strides = array<i32>} : memref<128x128xf32, #tpu.memory_space<vmem>>, vector<128x128xf32>,
    return
  }
  func.func @transform_0(%arg0: i32) -> (i32, i32) {
    %c0_i32 = arith.constant 0 : i32
    %c0_i32_0 = arith.constant 0 : i32
    return %arg0, %c0_i32 : i32, i32
  }
  func.func @transform_1(%arg0: i32) -> (i32, i32) {
    %c0_i32 = arith.constant 0 : i32
    %c0_i32_0 = arith.constant 0 : i32
    %c0_i32_1 = arith.constant 0 : i32
    return %c0_i32, %c0_i32_0 : i32, i32
  }
  func.func @transform_2(%arg0: i32) -> (i32, i32) {
    %c0_i32 = arith.constant 0 : i32
    %c0_i32_0 = arith.constant 0 : i32
    %c0_i32_1 = arith.constant 0 : i32
    return %c0_i32, %c0_i32_0 : i32, i32
  }
  func.func @transform_3(%arg0: i32) -> (i32, i32) {
    %c0_i32 = arith.constant 0 : i32
    %c0_i32_0 = arith.constant 0 : i32
    %c0_i32_1 = arith.constant 0 : i32
    return %c0_i32, %c0_i32_0 : i32, i32
  }
  func.func @transform_4(%arg0: i32) -> (i32, i32) {
    %c0_i32 = arith.constant 0 : i32
    %c0_i32_0 = arith.constant 0 : i32
    %c0_i32_1 = arith.constant 0 : i32
    return %c0_i32, %c0_i32_0 : i32, i32
  }
  func.func @transform_5(%arg0: i32) -> (i32, i32) {
    %c0_i32 = arith.constant 0 : i32
    %c0_i32_0 = arith.constant 0 : i32
    %c0_i32_1 = arith.constant 0 : i32
    return %c0_i32, %c0_i32_0 : i32, i32
  }
  func.func @transform_6(%arg0: i32) -> (i32, i32) {
    %c0_i32 = arith.constant 0 : i32
    %c0_i32_0 = arith.constant 0 : i32
    %c0_i32_1 = arith.constant 0 : i32
    return %c0_i32, %c0_i32_0 : i32, i32
  }
  func.func @transform_7(%arg0: i32) -> (i32, i32) {
    %c0_i32 = arith.constant 0 : i32
    %c0_i32_0 = arith.constant 0 : i32
    %c0_i32_1 = arith.constant 0 : i32
    return %c0_i32, %c0_i32_0 : i32, i32
  }
  func.func @transform_8(%arg0: i32) -> (i32, i32) {
    %c0_i32 = arith.constant 0 : i32
    %c0_i32_0 = arith.constant 0 : i32
    %c0_i32_1 = arith.constant 0 : i32
    return %c0_i32, %c0_i32_0 : i32, i32
  }
  func.func @transform_9(%arg0: i32) -> (i32, i32) {
    %c0_i32 = arith.constant 0 : i32
    %c0_i32_0 = arith.constant 0 : i32
    %c0_i32_1 = arith.constant 0 : i32
    return %c0_i32, %c0_i32_0 : i32, i32
  }
  func.func @transform_10(%arg0: i32) -> (i32, i32) {
    %c0_i32 = arith.constant 0 : i32
    %c0_i32_0 = arith.constant 0 : i32
    %c0_i32_1 = arith.constant 0 : i32
    return %c0_i32, %c0_i32_0 : i32, i32
  }
  func.func @transform_11(%arg0: i32) -> (i32, i32) {
    %c0_i32 = arith.constant 0 : i32
    %c0_i32_0 = arith.constant 0 : i32
    return %arg0, %c0_i32 : i32, i32
  }
}

</mosaic_0001>

<llo_original>
// kernel: mymodel_forward.1
$region0: #{mymodel_forward.1}
  #allocation0 [shape = 'u32[]', space=smem, size = 0x4, offset = 0x4, fixed_abs, tag = 'smem constant byte address 0x4 - core index']
  #allocation1 [shape = 'u32[144,128]{1,0:T(1,128)}', space=vmem, size = 0x12000, scoped, tag = 'internal scratch']
  %s0 = inlined_call_operand.vmem [shape: bf16[256,32], index: 0, kind: input, shape index: {}]
  %s1 = inlined_call_operand.vmem [shape: bf16[32,64], index: 1, kind: input, shape index: {}]
  %s2 = inlined_call_operand.vmem [shape: f32[1,64], index: 2, kind: input, shape index: {}]
  %s3 = inlined_call_operand.vmem [shape: f32[1,64], index: 3, kind: input, shape index: {}]
  %s4 = inlined_call_operand.vmem [shape: f32[1,64], index: 4, kind: input, shape index: {}]
  %s5 = inlined_call_operand.vmem [shape: bf16[64,64], index: 5, kind: input, shape index: {}]
  %s6 = inlined_call_operand.vmem [shape: f32[1,64], index: 6, kind: input, shape index: {}]
  %s7 = inlined_call_operand.vmem [shape: f32[1,64], index: 7, kind: input, shape index: {}]
  %s8 = inlined_call_operand.vmem [shape: f32[1,64], index: 8, kind: input, shape index: {}]
  %s9 = inlined_call_operand.vmem [shape: bf16[64,128], index: 9, kind: input, shape index: {}]
  %s10 = inlined_call_operand.vmem [shape: f32[1,128], index: 10, kind: input, shape index: {}]
  %s11 = inlined_call_operand.vmem [shape: f32[256,128], index: 11, kind: output, shape index: {}]
  %s12 = sld [smem:[#allocation0]]
  $region77: #{mymodel_forward.1} parent=0
    _
  %s14 = ssub.s32 1, %s12
  %s15 = scalar_select 0, %s14, %s12
  loop: start=0, step=1, limit=4
  $region2: #{mymodel_forward.1} parent=0 // loop_pre_header
    _
  $region3: #{mymodel_forward.1} parent=0 // loop_header
    %s17 = sphi 0, %s21
    %p18 = scmp.ge.s32.totalorder %s17, 4
    %s27 = sphi 0, %s29
    %s30 = sphi 0, %s27
    %s31 = sphi 0, %s30
    %s47 = sphi 0, %s31
    %s51 = sphi 0, %s51
    %s53 = sphi 0, %s51
    %s54 = sphi 0, %s53
    %s68 = sphi 0, %s54
    %s72 = sphi 0, %s72
    %s74 = sphi 0, %s72
    %s75 = sphi 0, %s74
    %s89 = sphi 0, %s75
    %s93 = sphi 0, %s93
    %s95 = sphi 0, %s93
    %s96 = sphi 0, %s95
    %s110 = sphi 0, %s96
    %s114 = sphi 0, %s114
    %s116 = sphi 0, %s114
    %s117 = sphi 0, %s116
    %s131 = sphi 0, %s117
    %s135 = sphi 0, %s135
    %s137 = sphi 0, %s135
    %s138 = sphi 0, %s137
    %s152 = sphi 0, %s138
    %s156 = sphi 0, %s156
    %s158 = sphi 0, %s156
    %s159 = sphi 0, %s158
    %s173 = sphi 0, %s159
    %s177 = sphi 0, %s177
    %s179 = sphi 0, %s177
    %s180 = sphi 0, %s179
    %s194 = sphi 0, %s180
    %s198 = sphi 0, %s198
    %s200 = sphi 0, %s198
    %s201 = sphi 0, %s200
    %s215 = sphi 0, %s201
    %s219 = sphi 0, %s219
    %s221 = sphi 0, %s219
    %s222 = sphi 0, %s221
    %s236 = sphi 0, %s222
    %s240 = sphi 0, %s240
    %s242 = sphi 0, %s240
    %s243 = sphi 0, %s242
    %s257 = sphi 0, %s243
    %s263 = sphi 0, %s265
    %s266 = sphi 0, %s263
    %s267 = sphi 0, %s266
    %s283 = sphi 0, %s267
  $region4: #{mymodel_forward.1} parent=0 // loop_header_branch
    %20 = sbr.rel (%p18) target = $region8
  $region5: #{mymodel_forward.1} parent=0 // loop_body
    %s22 = ssub.s32 %s17, 1
    %s23 = ssub.s32 %s17, 2
    %s24 = sadd.s32 %s17, 1
    %s25 = ssub.s32 %s17, %s24
    %p26 = scmp.eq.s32.totalorder %s25, 0
    %s28 = sadd.s32 %s27, 1
    %s29 = scalar_select %p26, %s27, %s28
    %p32 = pneg %p26
    %p33 = scmp.eq.s32.totalorder %s17, 1
    %p34 = por %p32, %p33
    %p35 = scmp.ne.s32.totalorder %s27, %s30
    %p36 = scmp.eq.s32.totalorder %s17, 0
    %p37 = por %p35, %p36
    %p38 = scmp.ne.s32.totalorder %s27, %s30
    %p39 = scmp.eq.s32.totalorder %s22, 1
    %p40 = por %p38, %p39
    %p41 = scmp.ne.s32.totalorder %s30, %s31
    %p42 = scmp.eq.s32.totalorder %s22, 0
    %p43 = por %p41, %p42
    %p44 = scmp.ne.s32.totalorder %s30, %s31
    %p45 = scmp.eq.s32.totalorder %s23, 1
    %p46 = por %p44, %p45
    %p48 = scmp.ne.s32.totalorder %s31, %s47
    %p49 = scmp.eq.s32.totalorder %s23, 0
    %p50 = por %p48, %p49
    %s52 = sadd.s32 %s51, 1
    %p55 = scmp.eq.s32.totalorder %s17, 1
    %p56 = scmp.ne.s32.totalorder %s51, %s53
    %p57 = scmp.eq.s32.totalorder %s17, 0
    %p58 = por %p56, %p57
    %p59 = scmp.ne.s32.totalorder %s51, %s53
    %p60 = scmp.eq.s32.totalorder %s22, 1
    %p61 = por %p59, %p60
    %p62 = scmp.ne.s32.totalorder %s53, %s54
    %p63 = scmp.eq.s32.totalorder %s22, 0
    %p64 = por %p62, %p63
    %p65 = scmp.ne.s32.totalorder %s53, %s54
    %p66 = scmp.eq.s32.totalorder %s23, 1
    %p67 = por %p65, %p66
    %p69 = scmp.ne.s32.totalorder %s54, %s68
    %p70 = scmp.eq.s32.totalorder %s23, 0
    %p71 = por %p69, %p70
    %s73 = sadd.s32 %s72, 1
    %p76 = scmp.eq.s32.totalorder %s17, 1
    %p77 = scmp.ne.s32.totalorder %s72, %s74
    %p78 = scmp.eq.s32.totalorder %s17, 0
    %p79 = por %p77, %p78
    %p80 = scmp.ne.s32.totalorder %s72, %s74
    %p81 = scmp.eq.s32.totalorder %s22, 1
    %p82 = por %p80, %p81
    %p83 = scmp.ne.s32.totalorder %s74, %s75
    %p84 = scmp.eq.s32.totalorder %s22, 0
    %p85 = por %p83, %p84
    %p86 = scmp.ne.s32.totalorder %s74, %s75
    %p87 = scmp.eq.s32.totalorder %s23, 1
    %p88 = por %p86, %p87
    %p90 = scmp.ne.s32.totalorder %s75, %s89
    %p91 = scmp.eq.s32.totalorder %s23, 0
    %p92 = por %p90, %p91
    %s94 = sadd.s32 %s93, 1
    %p97 = scmp.eq.s32.totalorder %s17, 1
    %p98 = scmp.ne.s32.totalorder %s93, %s95
    %p99 = scmp.eq.s32.totalorder %s17, 0
    %p100 = por %p98, %p99
    %p101 = scmp.ne.s32.totalorder %s93, %s95
    %p102 = scmp.eq.s32.totalorder %s22, 1
    %p103 = por %p101, %p102
    %p104 = scmp.ne.s32.totalorder %s95, %s96
    %p105 = scmp.eq.s32.totalorder %s22, 0
    %p106 = por %p104, %p105
    %p107 = scmp.ne.s32.totalorder %s95, %s96
    %p108 = scmp.eq.s32.totalorder %s23, 1
    %p109 = por %p107, %p108
    %p111 = scmp.ne.s32.totalorder %s96, %s110
    %p112 = scmp.eq.s32.totalorder %s23, 0
    %p113 = por %p111, %p112
    %s115 = sadd.s32 %s114, 1
    %p118 = scmp.eq.s32.totalorder %s17, 1
    %p119 = scmp.ne.s32.totalorder %s114, %s116
    %p120 = scmp.eq.s32.totalorder %s17, 0
    %p121 = por %p119, %p120
    %p122 = scmp.ne.s32.totalorder %s114, %s116
    %p123 = scmp.eq.s32.totalorder %s22, 1
    %p124 = por %p122, %p123
    %p125 = scmp.ne.s32.totalorder %s116, %s117
    %p126 = scmp.eq.s32.totalorder %s22, 0
    %p127 = por %p125, %p126
    %p128 = scmp.ne.s32.totalorder %s116, %s117
    %p129 = scmp.eq.s32.totalorder %s23, 1
    %p130 = por %p128, %p129
    %p132 = scmp.ne.s32.totalorder %s117, %s131
    %p133 = scmp.eq.s32.totalorder %s23, 0
    %p134 = por %p132, %p133
    %s136 = sadd.s32 %s135, 1
    %p139 = scmp.eq.s32.totalorder %s17, 1
    %p140 = scmp.ne.s32.totalorder %s135, %s137
    %p141 = scmp.eq.s32.totalorder %s17, 0
    %p142 = por %p140, %p141
    %p143 = scmp.ne.s32.totalorder %s135, %s137
    %p144 = scmp.eq.s32.totalorder %s22, 1
    %p145 = por %p143, %p144
    %p146 = scmp.ne.s32.totalorder %s137, %s138
    %p147 = scmp.eq.s32.totalorder %s22, 0
    %p148 = por %p146, %p147
    %p149 = scmp.ne.s32.totalorder %s137, %s138
    %p150 = scmp.eq.s32.totalorder %s23, 1
    %p151 = por %p149, %p150
    %p153 = scmp.ne.s32.totalorder %s138, %s152
    %p154 = scmp.eq.s32.totalorder %s23, 0
    %p155 = por %p153, %p154
    %s157 = sadd.s32 %s156, 1
    %p160 = scmp.eq.s32.totalorder %s17, 1
    %p161 = scmp.ne.s32.totalorder %s156, %s158
    %p162 = scmp.eq.s32.totalorder %s17, 0
    %p163 = por %p161, %p162
    %p164 = scmp.ne.s32.totalorder %s156, %s158
    %p165 = scmp.eq.s32.totalorder %s22, 1
    %p166 = por %p164, %p165
    %p167 = scmp.ne.s32.totalorder %s158, %s159
    %p168 = scmp.eq.s32.totalorder %s22, 0
    %p169 = por %p167, %p168
    %p170 = scmp.ne.s32.totalorder %s158, %s159
    %p171 = scmp.eq.s32.totalorder %s23, 1
    %p172 = por %p170, %p171
    %p174 = scmp.ne.s32.totalorder %s159, %s173
    %p175 = scmp.eq.s32.totalorder %s23, 0
    %p176 = por %p174, %p175
    %s178 = sadd.s32 %s177, 1
    %p181 = scmp.eq.s32.totalorder %s17, 1
    %p182 = scmp.ne.s32.totalorder %s177, %s179
    %p183 = scmp.eq.s32.totalorder %s17, 0
    %p184 = por %p182, %p183
    %p185 = scmp.ne.s32.totalorder %s177, %s179
    %p186 = scmp.eq.s32.totalorder %s22, 1
    %p187 = por %p185, %p186
    %p188 = scmp.ne.s32.totalorder %s179, %s180
    %p189 = scmp.eq.s32.totalorder %s22, 0
    %p190 = por %p188, %p189
    %p191 = scmp.ne.s32.totalorder %s179, %s180
    %p192 = scmp.eq.s32.totalorder %s23, 1
    %p193 = por %p191, %p192
    %p195 = scmp.ne.s32.totalorder %s180, %s194
    %p196 = scmp.eq.s32.totalorder %s23, 0
    %p197 = por %p195, %p196
    %s199 = sadd.s32 %s198, 1
    %p202 = scmp.eq.s32.totalorder %s17, 1
    %p203 = scmp.ne.s32.totalorder %s198, %s200
    %p204 = scmp.eq.s32.totalorder %s17, 0
    %p205 = por %p203, %p204
    %p206 = scmp.ne.s32.totalorder %s198, %s200
    %p207 = scmp.eq.s32.totalorder %s22, 1
    %p208 = por %p206, %p207
    %p209 = scmp.ne.s32.totalorder %s200, %s201
    %p210 = scmp.eq.s32.totalorder %s22, 0
    %p211 = por %p209, %p210
    %p212 = scmp.ne.s32.totalorder %s200, %s201
    %p213 = scmp.eq.s32.totalorder %s23, 1
    %p214 = por %p212, %p213
    %p216 = scmp.ne.s32.totalorder %s201, %s215
    %p217 = scmp.eq.s32.totalorder %s23, 0
    %p218 = por %p216, %p217
    %s220 = sadd.s32 %s219, 1
    %p223 = scmp.eq.s32.totalorder %s17, 1
    %p224 = scmp.ne.s32.totalorder %s219, %s221
    %p225 = scmp.eq.s32.totalorder %s17, 0
    %p226 = por %p224, %p225
    %p227 = scmp.ne.s32.totalorder %s219, %s221
    %p228 = scmp.eq.s32.totalorder %s22, 1
    %p229 = por %p227, %p228
    %p230 = scmp.ne.s32.totalorder %s221, %s222
    %p231 = scmp.eq.s32.totalorder %s22, 0
    %p232 = por %p230, %p231
    %p233 = scmp.ne.s32.totalorder %s221, %s222
    %p234 = scmp.eq.s32.totalorder %s23, 1
    %p235 = por %p233, %p234
    %p237 = scmp.ne.s32.totalorder %s222, %s236
    %p238 = scmp.eq.s32.totalorder %s23, 0
    %p239 = por %p237, %p238
    %s241 = sadd.s32 %s240, 1
    %p244 = scmp.eq.s32.totalorder %s17, 1
    %p245 = scmp.ne.s32.totalorder %s240, %s242
    %p246 = scmp.eq.s32.totalorder %s17, 0
    %p247 = por %p245, %p246
    %p248 = scmp.ne.s32.totalorder %s240, %s242
    %p249 = scmp.eq.s32.totalorder %s22, 1
    %p250 = por %p248, %p249
    %p251 = scmp.ne.s32.totalorder %s242, %s243
    %p252 = scmp.eq.s32.totalorder %s22, 0
    %p253 = por %p251, %p252
    %p254 = scmp.ne.s32.totalorder %s242, %s243
    %p255 = scmp.eq.s32.totalorder %s23, 1
    %p256 = por %p254, %p255
    %p258 = scmp.ne.s32.totalorder %s243, %s257
    %p259 = scmp.eq.s32.totalorder %s23, 0
    %p260 = por %p258, %p259
    %s261 = ssub.s32 %s17, %s24
    %p262 = scmp.eq.s32.totalorder %s261, 0
    %s264 = sadd.s32 %s263, 1
    %s265 = scalar_select %p262, %s263, %s264
    %p268 = pneg %p262
    %p269 = scmp.eq.s32.totalorder %s17, 1
    %p270 = por %p268, %p269
    %p271 = scmp.ne.s32.totalorder %s263, %s266
    %p272 = scmp.eq.s32.totalorder %s17, 0
    %p273 = por %p271, %p272
    %p274 = scmp.ne.s32.totalorder %s263, %s266
    %p275 = scmp.eq.s32.totalorder %s22, 1
    %p276 = por %p274, %p275
    %p277 = scmp.ne.s32.totalorder %s266, %s267
    %p278 = scmp.eq.s32.totalorder %s22, 0
    %p279 = por %p277, %p278
    %p280 = scmp.ne.s32.totalorder %s266, %s267
    %p281 = scmp.eq.s32.totalorder %s23, 1
    %p282 = por %p280, %p281
    %p284 = scmp.ne.s32.totalorder %s267, %s283
    %p285 = scmp.eq.s32.totalorder %s23, 0
    %p286 = por %p284, %p285
    %p287 = scmp.le.s32.totalorder 1, %s17
    %p288 = scmp.lt.s32.totalorder %s17, 3
    %p289 = pnand %p287, %p288
    %p290 = pneg %p289
    // Predicated region
    $region9: #{mymodel_forward.1} parent=5 // pred_check
      _
    $region10: #{mymodel_forward.1} parent=5 // pred_check_branch
      %292 = sbr.rel (%p289) target = $region12
    $region11: #{mymodel_forward.1} parent=5 // pred_region
      %s293 = ssub.s32 %s17, 1
      // Predicated region
      $region13: #{mymodel_forward.1} parent=11 // pred_check
        %p294 = pneg %p64
      $region14: #{mymodel_forward.1} parent=11 // pred_check_branch
        %296 = sbr.rel (%p294) target = $region16
      $region15: #{mymodel_forward.1} parent=11 // pred_region
        _
      $region16: #{mymodel_forward.1} parent=11 // pred_fallthru
        _
      // Predicated region
      $region17: #{mymodel_forward.1} parent=11 // pred_check
        %p297 = pneg %p85
      $region18: #{mymodel_forward.1} parent=11 // pred_check_branch
        %299 = sbr.rel (%p297) target = $region20
      $region19: #{mymodel_forward.1} parent=11 // pred_region
        _
      $region20: #{mymodel_forward.1} parent=11 // pred_fallthru
        _
      // Predicated region
      $region21: #{mymodel_forward.1} parent=11 // pred_check
        %p300 = pneg %p106
      $region22: #{mymodel_forward.1} parent=11 // pred_check_branch
        %302 = sbr.rel (%p300) target = $region24
      $region23: #{mymodel_forward.1} parent=11 // pred_region
        _
      $region24: #{mymodel_forward.1} parent=11 // pred_fallthru
        _
      // Predicated region
      $region25: #{mymodel_forward.1} parent=11 // pred_check
        %p303 = pneg %p127
      $region26: #{mymodel_forward.1} parent=11 // pred_check_branch
        %305 = sbr.rel (%p303) target = $region28
      $region27: #{mymodel_forward.1} parent=11 // pred_region
        _
      $region28: #{mymodel_forward.1} parent=11 // pred_fallthru
        _
      // Predicated region
      $region29: #{mymodel_forward.1} parent=11 // pred_check
        %p306 = pneg %p148
      $region30: #{mymodel_forward.1} parent=11 // pred_check_branch
        %308 = sbr.rel (%p306) target = $region32
      $region31: #{mymodel_forward.1} parent=11 // pred_region
        _
      $region32: #{mymodel_forward.1} parent=11 // pred_fallthru
        _
      // Predicated region
      $region33: #{mymodel_forward.1} parent=11 // pred_check
        %p309 = pneg %p169
      $region34: #{mymodel_forward.1} parent=11 // pred_check_branch
        %311 = sbr.rel (%p309) target = $region36
      $region35: #{mymodel_forward.1} parent=11 // pred_region
        _
      $region36: #{mymodel_forward.1} parent=11 // pred_fallthru
        _
      // Predicated region
      $region37: #{mymodel_forward.1} parent=11 // pred_check
        %p312 = pneg %p190
      $region38: #{mymodel_forward.1} parent=11 // pred_check_branch
        %314 = sbr.rel (%p312) target = $region40
      $region39: #{mymodel_forward.1} parent=11 // pred_region
        _
      $region40: #{mymodel_forward.1} parent=11 // pred_fallthru
        _
      // Predicated region
      $region41: #{mymodel_forward.1} parent=11 // pred_check
        %p315 = pneg %p211
      $region42: #{mymodel_forward.1} parent=11 // pred_check_branch
        %317 = sbr.rel (%p315) target = $region44
      $region43: #{mymodel_forward.1} parent=11 // pred_region
        _
      $region44: #{mymodel_forward.1} parent=11 // pred_fallthru
        _
      // Predicated region
      $region45: #{mymodel_forward.1} parent=11 // pred_check
        %p318 = pneg %p232
      $region46: #{mymodel_forward.1} parent=11 // pred_check_branch
        %320 = sbr.rel (%p318) target = $region48
      $region47: #{mymodel_forward.1} parent=11 // pred_region
        _
      $region48: #{mymodel_forward.1} parent=11 // pred_fallthru
        _
      // Predicated region
      $region49: #{mymodel_forward.1} parent=11 // pred_check
        %p321 = pneg %p253
      $region50: #{mymodel_forward.1} parent=11 // pred_check_branch
        %323 = sbr.rel (%p321) target = $region52
      $region51: #{mymodel_forward.1} parent=11 // pred_region
        _
      $region52: #{mymodel_forward.1} parent=11 // pred_fallthru
        _
    $region12: #{mymodel_forward.1} parent=5 // pred_fallthru
      _
    %p324 = scmp.lt.s32.totalorder %s17, 2
    // Predicated region
    $region53: #{mymodel_forward.1} parent=5 // pred_check
      %p325 = pneg %p324
    $region54: #{mymodel_forward.1} parent=5 // pred_check_branch
      %327 = sbr.rel (%p325) target = $region56
    $region55: #{mymodel_forward.1} parent=5 // pred_region
      // Predicated region
      $region57: #{mymodel_forward.1} parent=55 // pred_check
        %p328 = pneg %p37
      $region58: #{mymodel_forward.1} parent=55 // pred_check_branch
        %330 = sbr.rel (%p328) target = $region60
      $region59: #{mymodel_forward.1} parent=55 // pred_region
        %s331 = smul.u32 16, %s17
        %p332 = scmp.lt.s32.totalorder %s331, 31
        %s333 = scalar_select %p332, %s331, 31
        %s334 = smul.addr %s333, 4
        %s335 = scalar_lea.vmem %s0, %s334
        %s336 = smul.u32 16, %s17
      $region60: #{mymodel_forward.1} parent=55 // pred_fallthru
        _
    $region56: #{mymodel_forward.1} parent=5 // pred_fallthru
      _
    %p337 = scmp.le.s32.totalorder 1, %s17
    %p338 = scmp.lt.s32.totalorder %s17, 3
    %p339 = pnand %p337, %p338
    %p340 = pneg %p339
    // Predicated region
    $region61: #{mymodel_forward.1} parent=5 // pred_check
      _
    $region62: #{mymodel_forward.1} parent=5 // pred_check_branch
      %342 = sbr.rel (%p339) target = $region64
    $region63: #{mymodel_forward.1} parent=5 // pred_region
      %s343 = ssub.s32 %s17, 1
      %s344 = smul.u32 16, %s22
      %p345 = scmp.lt.s32.totalorder %s344, 31
      %s346 = scalar_select %p345, %s344, 31
      %s347 = smul.addr %s346, 4
      %s348 = scalar_lea.vmem %s0, %s347
      %p349 = pneg %p43
      %p350 = pneg %p40
      %p351 = pneg %p64
      %p352 = pneg %p61
      %p353 = pneg %p85
      %p354 = pneg %p82
      %p355 = pneg %p106
      %p356 = pneg %p103
      %p357 = pneg %p127
      %p358 = pneg %p124
      %p359 = pneg %p148
      %p360 = pneg %p145
      %p361 = pneg %p169
      %p362 = pneg %p166
      %p363 = pneg %p190
      %p364 = pneg %p187
      %p365 = pneg %p211
      %p366 = pneg %p208
      %p367 = pneg %p232
      %p368 = pneg %p229
      %p369 = pneg %p253
      %p370 = pneg %p250
      %p371 = pneg %p279
      %p372 = pneg %p276
      %s373 = smul.u32 16, %s22
      %p374 = scmp.lt.s32.totalorder %s373, 31
      %s375 = scalar_select %p374, %s373, 31
      %s376 = smul.addr %s375, 8
      %s377 = scalar_lea.vmem %s11, %s376
      %s378 = smul.u32 16, %s22
      %p379 = scmp.lt.s32.totalorder %s378, 31
      %s380 = scalar_select %p379, %s378, 31
      %s381 = smul.addr %s380, 4
      %s382 = scalar_lea.vmem %s0, %s381
      %s383 = smul.u32 16, %s22
      %s384 = smul.u32 16, %s22
      %p385 = scmp.lt.s32.totalorder %s384, 31
      %s386 = scalar_select %p385, %s384, 31
      %s387 = smul.addr %s386, 8
      %s388 = scalar_lea.vmem %s11, %s387
      %s389 = smul.u32 16, %s22
      %v391 = vld [vmem:[%s382] sm:$0xf]
      %v392 = vld [vmem:[%s382 + $0x4] sm:$0xf]
      %v393 = vld [vmem:[%s382 + $0x8] sm:$0xf]
      %v394 = vld [vmem:[%s382 + $0xc] sm:$0xf]
      %v395 = vld [vmem:[%s382 + $0x10] sm:$0xf]
      %v396 = vld [vmem:[%s382 + $0x14] sm:$0xf]
      %v397 = vld [vmem:[%s382 + $0x18] sm:$0xf]
      %v398 = vld [vmem:[%s382 + $0x1c] sm:$0xf]
      %v399 = vld [vmem:[%s382 + $0x20] sm:$0xf]
      %v400 = vld [vmem:[%s382 + $0x24] sm:$0xf]
      %v401 = vld [vmem:[%s382 + $0x28] sm:$0xf]
      %v402 = vld [vmem:[%s382 + $0x2c] sm:$0xf]
      %v403 = vld [vmem:[%s382 + $0x30] sm:$0xf]
      %v404 = vld [vmem:[%s382 + $0x34] sm:$0xf]
      %v405 = vld [vmem:[%s382 + $0x38] sm:$0xf]
      %v406 = vld [vmem:[%s382 + $0x3c] sm:$0xf]
      %v407 = vld [vmem:[%s1] sm:$0xf]
      %v408 = vld [vmem:[%s1 + $0x4] sm:$0xf]
      %v409 = vld [vmem:[%s1 + $0x8] sm:$0xf]
      %v410 = vld [vmem:[%s1 + $0xc] sm:$0xf]
      %v411 = vld [vmem:[%s2] sm:$0x1]
      %v413 = vlaneseq
      %v414 = vshrl.u32 %v413, 7
      %v415 = vsub.s32 0, %v414
      %v416 = vrot.slane %v411, %v415
      %v434 = vunpack.c.l.b16 %v391
      %v435 = vunpack.c.l.b16 %v392
      %v436 = vunpack.c.l.b16 %v393
      %v437 = vunpack.c.l.b16 %v394
      %v438 = vunpack.c.l.b16 %v395
      %v439 = vunpack.c.l.b16 %v396
      %v440 = vunpack.c.l.b16 %v397
      %v441 = vunpack.c.l.b16 %v398
      %v442 = vunpack.c.l.b16 %v399
      %v443 = vunpack.c.l.b16 %v400
      %v444 = vunpack.c.l.b16 %v401
      %v445 = vunpack.c.l.b16 %v402
      %v446 = vunpack.c.l.b16 %v403
      %v447 = vunpack.c.l.b16 %v404
      %v448 = vunpack.c.l.b16 %v405
      %v449 = vunpack.c.l.b16 %v406
      %v450 = vpack.c.b16 %v435, %v434
      %v451 = vpack.c.b16 %v437, %v436
      %v452 = vpack.c.b16 %v439, %v438
      %v453 = vpack.c.b16 %v441, %v440
      %v454 = vpack.c.b16 %v443, %v442
      %v455 = vpack.c.b16 %v445, %v444
      %v456 = vpack.c.b16 %v447, %v446
      %v457 = vpack.c.b16 %v449, %v448
      %v462 = vunpack.c.l.b16 %v407
      %v463 = vunpack.c.l.b16 %v408
      %v464 = vunpack.c.l.b16 %v409
      %v465 = vunpack.c.l.b16 %v410
      %v466 = vpack.c.b16 %v463, %v462
      %v467 = vpack.c.b16 %v465, %v464
      %vm470 = vcmask 261120
      %v472 = vsel %vm470, %v450, 0
      %v475 = vsel %vm470, %v451, 0
      %v478 = vsel %vm470, %v452, 0
      %v481 = vsel %vm470, %v453, 0
      %v484 = vsel %vm470, %v454, 0
      %v487 = vsel %vm470, %v455, 0
      %v490 = vsel %vm470, %v456, 0
      %v493 = vsel %vm470, %v457, 0
      %495 = vmatprep.subr.bf16.mxu0 0
      %496 = vmatpush1.bf16.msra.mxu0 0
      %497 = vmatprep.subr.bf16.mxu0 0
      %498 = vmatpush1.bf16.msra.mxu0 0
      %499 = vmatprep.subr.bf16.mxu0 0
      %500 = vmatpush1.bf16.msra.mxu0 0
      %501 = vmatprep.subr.bf16.mxu0 0
      %502 = vmatpush1.bf16.msra.mxu0 0
      %503 = vmatprep.subr.bf16.mxu0 0
      %504 = vmatpush1.bf16.msra.mxu0 0
      %505 = vmatprep.subr.bf16.mxu0 0
      %506 = vmatpush1.bf16.msra.mxu0 0
      %507 = vmatprep.subr.bf16.mxu0 0
      %508 = vmatpush1.bf16.msra.mxu0 %v467
      %509 = vmatprep.subr.bf16.mxu0 0
      %510 = vmatpush1.bf16.msra.mxu0 %v466
      %511 = vmatprep.subr.bf16.mxu0 0
      %512 = vmatpush2.bf16.msra.mxu0 0
      %513 = vmatprep.subr.bf16.mxu0 0
      %514 = vmatpush2.bf16.msra.mxu0 0
      %515 = vmatprep.subr.bf16.mxu0 0
      %516 = vmatpush2.bf16.msra.mxu0 0
      %517 = vmatprep.subr.bf16.mxu0 0
      %518 = vmatpush2.bf16.msra.mxu0 0
      %519 = vmatprep.subr.bf16.mxu0 0
      %520 = vmatpush2.bf16.msra.mxu0 0
      %521 = vmatprep.subr.bf16.mxu0 0
      %522 = vmatpush2.bf16.msra.mxu0 0
      %523 = vmatprep.subr.bf16.mxu0 0
      %524 = vmatpush2.bf16.msra.mxu0 0
      %525 = vmatprep.subr.bf16.mxu0 0
      %526 = vmatpush2.bf16.msra.mxu0 0
      %527 = vmatprep.mubr.bf16.mxu0 0
      %528 = vmatmul.mubr.bf16.gmra.mxu0 %v472
      %v529 = vpop.f32.mrf.mxu0
      %v530 = vadd.f32 %v416, %v529
      %v531 = vpop.f32.mrf.mxu0
      %v532 = vpop.f32.mrf.mxu0
      %v533 = vadd.f32 %v416, %v532
      %v534 = vpop.f32.mrf.mxu0
      %535 = vmatprep.mubr.bf16.mxu0 0
      %536 = vmatmul.mubr.bf16.gmra.mxu0 %v475
      %v537 = vpop.f32.mrf.mxu0
      %v538 = vadd.f32 %v416, %v537
      %v539 = vpop.f32.mrf.mxu0
      %v540 = vpop.f32.mrf.mxu0
      %v541 = vadd.f32 %v416, %v540
      %v542 = vpop.f32.mrf.mxu0
      %543 = vmatprep.mubr.bf16.mxu0 0
      %544 = vmatmul.mubr.bf16.gmra.mxu0 %v478
      %v545 = vpop.f32.mrf.mxu0
      %v546 = vadd.f32 %v416, %v545
      %v547 = vpop.f32.mrf.mxu0
      %v548 = vpop.f32.mrf.mxu0
      %v549 = vadd.f32 %v416, %v548
      %v550 = vpop.f32.mrf.mxu0
      %551 = vmatprep.mubr.bf16.mxu0 0
      %552 = vmatmul.mubr.bf16.gmra.mxu0 %v481
      %v553 = vpop.f32.mrf.mxu0
      %v554 = vadd.f32 %v416, %v553
      %v555 = vpop.f32.mrf.mxu0
      %v556 = vpop.f32.mrf.mxu0
      %v557 = vadd.f32 %v416, %v556
      %v558 = vpop.f32.mrf.mxu0
      %559 = vmatprep.mubr.bf16.mxu0 0
      %560 = vmatmul.mubr.bf16.gmra.mxu0 %v484
      %v561 = vpop.f32.mrf.mxu0
      %v562 = vadd.f32 %v416, %v561
      %v563 = vpop.f32.mrf.mxu0
      %v564 = vpop.f32.mrf.mxu0
      %v565 = vadd.f32 %v416, %v564
      %v566 = vpop.f32.mrf.mxu0
      %567 = vmatprep.mubr.bf16.mxu0 0
      %568 = vmatmul.mubr.bf16.gmra.mxu0 %v487
      %v569 = vpop.f32.mrf.mxu0
      %v570 = vadd.f32 %v416, %v569
      %v571 = vpop.f32.mrf.mxu0
      %v572 = vpop.f32.mrf.mxu0
      %v573 = vadd.f32 %v416, %v572
      %v574 = vpop.f32.mrf.mxu0
      %575 = vmatprep.mubr.bf16.mxu0 0
      %576 = vmatmul.mubr.bf16.gmra.mxu0 %v490
      %v577 = vpop.f32.mrf.mxu0
      %v578 = vadd.f32 %v416, %v577
      %v579 = vpop.f32.mrf.mxu0
      %v580 = vpop.f32.mrf.mxu0
      %v581 = vadd.f32 %v416, %v580
      %v582 = vpop.f32.mrf.mxu0
      %583 = vmatprep.mubr.bf16.mxu0 0
      %584 = vmatmul.mubr.bf16.gmra.mxu0 %v493
      %v585 = vpop.f32.mrf.mxu0
      %v586 = vadd.f32 %v416, %v585
      %v587 = vpop.f32.mrf.mxu0
      %v588 = vpop.f32.mrf.mxu0
      %v589 = vadd.f32 %v416, %v588
      %v590 = vpop.f32.mrf.mxu0
      %591 = vdwg.mxu0
      %v592 = vld [vmem:[%s3] sm:$0x1]
      %v593 = vld [vmem:[%s4] sm:$0x1]
      %vm594 = vcmask 523264
      %v595 = vsel %vm594, %v530, 0.0
      %596 = vadd.xlane.f32.xlu0 %v595
      %v597 = vpop.xlane.xlu0 %596
      %v598 = vsel %vm594, %v533, 0.0
      %599 = vadd.xlane.f32.xlu0 %v598
      %v600 = vpop.xlane.xlu0 %599
      %v601 = vsel %vm594, %v538, 0.0
      %602 = vadd.xlane.f32.xlu0 %v601
      %v603 = vpop.xlane.xlu0 %602
      %v604 = vsel %vm594, %v541, 0.0
      %605 = vadd.xlane.f32.xlu0 %v604
      %v606 = vpop.xlane.xlu0 %605
      %v607 = vsel %vm594, %v546, 0.0
      %608 = vadd.xlane.f32.xlu0 %v607
      %v609 = vpop.xlane.xlu0 %608
      %v610 = vsel %vm594, %v549, 0.0
      %611 = vadd.xlane.f32.xlu0 %v610
      %v612 = vpop.xlane.xlu0 %611
      %v613 = vsel %vm594, %v554, 0.0
      %614 = vadd.xlane.f32.xlu0 %v613
      %v615 = vpop.xlane.xlu0 %614
      %v616 = vsel %vm594, %v557, 0.0
      %617 = vadd.xlane.f32.xlu0 %v616
      %v618 = vpop.xlane.xlu0 %617
      %v619 = vsel %vm594, %v562, 0.0
      %620 = vadd.xlane.f32.xlu0 %v619
      %v621 = vpop.xlane.xlu0 %620
      %v622 = vsel %vm594, %v565, 0.0
      %623 = vadd.xlane.f32.xlu0 %v622
      %v624 = vpop.xlane.xlu0 %623
      %v625 = vsel %vm594, %v570, 0.0
      %626 = vadd.xlane.f32.xlu0 %v625
      %v627 = vpop.xlane.xlu0 %626
      %v628 = vsel %vm594, %v573, 0.0
      %629 = vadd.xlane.f32.xlu0 %v628
      %v630 = vpop.xlane.xlu0 %629
      %v631 = vsel %vm594, %v578, 0.0
      %632 = vadd.xlane.f32.xlu0 %v631
      %v633 = vpop.xlane.xlu0 %632
      %v634 = vsel %vm594, %v581, 0.0
      %635 = vadd.xlane.f32.xlu0 %v634
      %v636 = vpop.xlane.xlu0 %635
      %v637 = vsel %vm594, %v586, 0.0
      %638 = vadd.xlane.f32.xlu0 %v637
      %v639 = vpop.xlane.xlu0 %638
      %v640 = vsel %vm594, %v589, 0.0
      %641 = vadd.xlane.f32.xlu0 %v640
      %v642 = vpop.xlane.xlu0 %641
      %v643 = vrcp.pop 64.0
      %v644 = vmul.f32 %v597, %v643
      %v645 = vmul.f32 %v600, %v643
      %v646 = vmul.f32 %v603, %v643
      %v647 = vmul.f32 %v606, %v643
      %v648 = vmul.f32 %v609, %v643
      %v649 = vmul.f32 %v612, %v643
      %v650 = vmul.f32 %v615, %v643
      %v651 = vmul.f32 %v618, %v643
      %v652 = vmul.f32 %v621, %v643
      %v653 = vmul.f32 %v624, %v643
      %v654 = vmul.f32 %v627, %v643
      %v655 = vmul.f32 %v630, %v643
      %v656 = vmul.f32 %v633, %v643
      %v657 = vmul.f32 %v636, %v643
      %v658 = vmul.f32 %v639, %v643
      %v659 = vmul.f32 %v642, %v643
      %v660 = vmul.f32 %v530, %v530
      %v661 = vmul.f32 %v533, %v533
      %v662 = vmul.f32 %v538, %v538
      %v663 = vmul.f32 %v541, %v541
      %v664 = vmul.f32 %v546, %v546
      %v665 = vmul.f32 %v549, %v549
      %v666 = vmul.f32 %v554, %v554
      %v667 = vmul.f32 %v557, %v557
      %v668 = vmul.f32 %v562, %v562
      %v669 = vmul.f32 %v565, %v565
      %v670 = vmul.f32 %v570, %v570
      %v671 = vmul.f32 %v573, %v573
      %v672 = vmul.f32 %v578, %v578
      %v673 = vmul.f32 %v581, %v581
      %v674 = vmul.f32 %v586, %v586
      %v675 = vmul.f32 %v589, %v589
      %v676 = vsel %vm594, %v660, 0.0
      %677 = vadd.xlane.f32.xlu0 %v676
      %v678 = vpop.xlane.xlu0 %677
      %v679 = vsel %vm594, %v661, 0.0
      %680 = vadd.xlane.f32.xlu0 %v679
      %v681 = vpop.xlane.xlu0 %680
      %v682 = vsel %vm594, %v662, 0.0
      %683 = vadd.xlane.f32.xlu0 %v682
      %v684 = vpop.xlane.xlu0 %683
      %v685 = vsel %vm594, %v663, 0.0
      %686 = vadd.xlane.f32.xlu0 %v685
      %v687 = vpop.xlane.xlu0 %686
      %v688 = vsel %vm594, %v664, 0.0
      %689 = vadd.xlane.f32.xlu0 %v688
      %v690 = vpop.xlane.xlu0 %689
      %v691 = vsel %vm594, %v665, 0.0
      %692 = vadd.xlane.f32.xlu0 %v691
      %v693 = vpop.xlane.xlu0 %692
      %v694 = vsel %vm594, %v666, 0.0
      %695 = vadd.xlane.f32.xlu0 %v694
      %v696 = vpop.xlane.xlu0 %695
      %v697 = vsel %vm594, %v667, 0.0
      %698 = vadd.xlane.f32.xlu0 %v697
      %v699 = vpop.xlane.xlu0 %698
      %v700 = vsel %vm594, %v668, 0.0
      %701 = vadd.xlane.f32.xlu0 %v700
      %v702 = vpop.xlane.xlu0 %701
      %v703 = vsel %vm594, %v669, 0.0
      %704 = vadd.xlane.f32.xlu0 %v703
      %v705 = vpop.xlane.xlu0 %704
      %v706 = vsel %vm594, %v670, 0.0
      %707 = vadd.xlane.f32.xlu0 %v706
      %v708 = vpop.xlane.xlu0 %707
      %v709 = vsel %vm594, %v671, 0.0
      %710 = vadd.xlane.f32.xlu0 %v709
      %v711 = vpop.xlane.xlu0 %710
      %v712 = vsel %vm594, %v672, 0.0
      %713 = vadd.xlane.f32.xlu0 %v712
      %v714 = vpop.xlane.xlu0 %713
      %v715 = vsel %vm594, %v673, 0.0
      %716 = vadd.xlane.f32.xlu0 %v715
      %v717 = vpop.xlane.xlu0 %716
      %v718 = vsel %vm594, %v674, 0.0
      %719 = vadd.xlane.f32.xlu0 %v718
      %v720 = vpop.xlane.xlu0 %719
      %v721 = vsel %vm594, %v675, 0.0
      %722 = vadd.xlane.f32.xlu0 %v721
      %v723 = vpop.xlane.xlu0 %722
      %v724 = vmul.f32 %v678, %v643
      %v725 = vmul.f32 %v681, %v643
      %v726 = vmul.f32 %v684, %v643
      %v727 = vmul.f32 %v687, %v643
      %v728 = vmul.f32 %v690, %v643
      %v729 = vmul.f32 %v693, %v643
      %v730 = vmul.f32 %v696, %v643
      %v731 = vmul.f32 %v699, %v643
      %v732 = vmul.f32 %v702, %v643
      %v733 = vmul.f32 %v705, %v643
      %v734 = vmul.f32 %v708, %v643
      %v735 = vmul.f32 %v711, %v643
      %v736 = vmul.f32 %v714, %v643
      %v737 = vmul.f32 %v717, %v643
      %v738 = vmul.f32 %v720, %v643
      %v739 = vmul.f32 %v723, %v643
      %v740 = vmul.f32 %v644, %v644
      %v741 = vmul.f32 %v645, %v645
      %v742 = vmul.f32 %v646, %v646
      %v743 = vmul.f32 %v647, %v647
      %v744 = vmul.f32 %v648, %v648
      %v745 = vmul.f32 %v649, %v649
      %v746 = vmul.f32 %v650, %v650
      %v747 = vmul.f32 %v651, %v651
      %v748 = vmul.f32 %v652, %v652
      %v749 = vmul.f32 %v653, %v653
      %v750 = vmul.f32 %v654, %v654
      %v751 = vmul.f32 %v655, %v655
      %v752 = vmul.f32 %v656, %v656
      %v753 = vmul.f32 %v657, %v657
      %v754 = vmul.f32 %v658, %v658
      %v755 = vmul.f32 %v659, %v659
      %v756 = vsub.f32 %v724, %v740
      %v757 = vsub.f32 %v725, %v741
      %v758 = vsub.f32 %v726, %v742
      %v759 = vsub.f32 %v727, %v743
      %v760 = vsub.f32 %v728, %v744
      %v761 = vsub.f32 %v729, %v745
      %v762 = vsub.f32 %v730, %v746
      %v763 = vsub.f32 %v731, %v747
      %v764 = vsub.f32 %v732, %v748
      %v765 = vsub.f32 %v733, %v749
      %v766 = vsub.f32 %v734, %v750
      %v767 = vsub.f32 %v735, %v751
      %v768 = vsub.f32 %v736, %v752
      %v769 = vsub.f32 %v737, %v753
      %v770 = vsub.f32 %v738, %v754
      %v771 = vsub.f32 %v739, %v755
      %v772 = vmax.f32 %v756, 0.0
      %v773 = vmax.f32 %v757, 0.0
      %v774 = vmax.f32 %v758, 0.0
      %v775 = vmax.f32 %v759, 0.0
      %v776 = vmax.f32 %v760, 0.0
      %v777 = vmax.f32 %v761, 0.0
      %v778 = vmax.f32 %v762, 0.0
      %v779 = vmax.f32 %v763, 0.0
      %v780 = vmax.f32 %v764, 0.0
      %v781 = vmax.f32 %v765, 0.0
      %v782 = vmax.f32 %v766, 0.0
      %v783 = vmax.f32 %v767, 0.0
      %v784 = vmax.f32 %v768, 0.0
      %v785 = vmax.f32 %v769, 0.0
      %v786 = vmax.f32 %v770, 0.0
      %v787 = vmax.f32 %v771, 0.0
      %v788 = vsub.f32 %v530, %v644
      %v789 = vsub.f32 %v533, %v645
      %v790 = vsub.f32 %v538, %v646
      %v791 = vsub.f32 %v541, %v647
      %v792 = vsub.f32 %v546, %v648
      %v793 = vsub.f32 %v549, %v649
      %v794 = vsub.f32 %v554, %v650
      %v795 = vsub.f32 %v557, %v651
      %v796 = vsub.f32 %v562, %v652
      %v797 = vsub.f32 %v565, %v653
      %v798 = vsub.f32 %v570, %v654
      %v799 = vsub.f32 %v573, %v655
      %v800 = vsub.f32 %v578, %v656
      %v801 = vsub.f32 %v581, %v657
      %v802 = vsub.f32 %v586, %v658
      %v803 = vsub.f32 %v589, %v659
      %v804 = vadd.f32 %v772, 1e-05
      %v805 = vadd.f32 %v773, 1e-05
      %v806 = vadd.f32 %v774, 1e-05
      %v807 = vadd.f32 %v775, 1e-05
      %v808 = vadd.f32 %v776, 1e-05
      %v809 = vadd.f32 %v777, 1e-05
      %v810 = vadd.f32 %v778, 1e-05
      %v811 = vadd.f32 %v779, 1e-05
      %v812 = vadd.f32 %v780, 1e-05
      %v813 = vadd.f32 %v781, 1e-05
      %v814 = vadd.f32 %v782, 1e-05
      %v815 = vadd.f32 %v783, 1e-05
      %v816 = vadd.f32 %v784, 1e-05
      %v817 = vadd.f32 %v785, 1e-05
      %v818 = vadd.f32 %v786, 1e-05
      %v819 = vadd.f32 %v787, 1e-05
      %v820 = vrsqrt.pop %v804
      %v821 = vrsqrt.pop %v805
      %v822 = vrsqrt.pop %v806
      %v823 = vrsqrt.pop %v807
      %v824 = vrsqrt.pop %v808
      %v825 = vrsqrt.pop %v809
      %v826 = vrsqrt.pop %v810
      %v827 = vrsqrt.pop %v811
      %v828 = vrsqrt.pop %v812
      %v829 = vrsqrt.pop %v813
      %v830 = vrsqrt.pop %v814
      %v831 = vrsqrt.pop %v815
      %v832 = vrsqrt.pop %v816
      %v833 = vrsqrt.pop %v817
      %v834 = vrsqrt.pop %v818
      %v835 = vrsqrt.pop %v819
      %v836 = vmul.f32 %v788, %v820
      %v837 = vmul.f32 %v789, %v821
      %v838 = vmul.f32 %v790, %v822
      %v839 = vmul.f32 %v791, %v823
      %v840 = vmul.f32 %v792, %v824
      %v841 = vmul.f32 %v793, %v825
      %v842 = vmul.f32 %v794, %v826
      %v843 = vmul.f32 %v795, %v827
      %v844 = vmul.f32 %v796, %v828
      %v845 = vmul.f32 %v797, %v829
      %v846 = vmul.f32 %v798, %v830
      %v847 = vmul.f32 %v799, %v831
      %v848 = vmul.f32 %v800, %v832
      %v849 = vmul.f32 %v801, %v833
      %v850 = vmul.f32 %v802, %v834
      %v851 = vmul.f32 %v803, %v835
      %v853 = vlaneseq
      %v854 = vshrl.u32 %v853, 7
      %v855 = vsub.s32 0, %v854
      %v856 = vrot.slane %v592, %v855
      %v858 = vmul.f32 %v836, %v856
      %v859 = vmul.f32 %v837, %v856
      %v860 = vmul.f32 %v838, %v856
      %v861 = vmul.f32 %v839, %v856
      %v862 = vmul.f32 %v840, %v856
      %v863 = vmul.f32 %v841, %v856
      %v864 = vmul.f32 %v842, %v856
      %v865 = vmul.f32 %v843, %v856
      %v866 = vmul.f32 %v844, %v856
      %v867 = vmul.f32 %v845, %v856
      %v868 = vmul.f32 %v846, %v856
      %v869 = vmul.f32 %v847, %v856
      %v870 = vmul.f32 %v848, %v856
      %v871 = vmul.f32 %v849, %v856
      %v872 = vmul.f32 %v850, %v856
      %v873 = vmul.f32 %v851, %v856
      %v875 = vlaneseq
      %v876 = vshrl.u32 %v875, 7
      %v877 = vsub.s32 0, %v876
      %v878 = vrot.slane %v593, %v877
      %v880 = vadd.f32 %v858, %v878
      %v881 = vadd.f32 %v859, %v878
      %v882 = vadd.f32 %v860, %v878
      %v883 = vadd.f32 %v861, %v878
      %v884 = vadd.f32 %v862, %v878
      %v885 = vadd.f32 %v863, %v878
      %v886 = vadd.f32 %v864, %v878
      %v887 = vadd.f32 %v865, %v878
      %v888 = vadd.f32 %v866, %v878
      %v889 = vadd.f32 %v867, %v878
      %v890 = vadd.f32 %v868, %v878
      %v891 = vadd.f32 %v869, %v878
      %v892 = vadd.f32 %v870, %v878
      %v893 = vadd.f32 %v871, %v878
      %v894 = vadd.f32 %v872, %v878
      %v895 = vadd.f32 %v873, %v878
      %v896 = vmax.f32 %v880, 0.0
      %v897 = vmax.f32 %v881, 0.0
      %v898 = vmax.f32 %v882, 0.0
      %v899 = vmax.f32 %v883, 0.0
      %v900 = vmax.f32 %v884, 0.0
      %v901 = vmax.f32 %v885, 0.0
      %v902 = vmax.f32 %v886, 0.0
      %v903 = vmax.f32 %v887, 0.0
      %v904 = vmax.f32 %v888, 0.0
      %v905 = vmax.f32 %v889, 0.0
      %v906 = vmax.f32 %v890, 0.0
      %v907 = vmax.f32 %v891, 0.0
      %v908 = vmax.f32 %v892, 0.0
      %v909 = vmax.f32 %v893, 0.0
      %v910 = vmax.f32 %v894, 0.0
      %v911 = vmax.f32 %v895, 0.0
      %v912 = vpack.c.bf16 %v897, %v896
      %v913 = vpack.c.bf16 %v899, %v898
      %v914 = vpack.c.bf16 %v901, %v900
      %v915 = vpack.c.bf16 %v903, %v902
      %v916 = vpack.c.bf16 %v905, %v904
      %v917 = vpack.c.bf16 %v907, %v906
      %v918 = vpack.c.bf16 %v909, %v908
      %v919 = vpack.c.bf16 %v911, %v910
      %v920 = vld [vmem:[%s5] sm:$0xf]
      %v921 = vld [vmem:[%s5 + $0x4] sm:$0xf]
      %v922 = vld [vmem:[%s5 + $0x8] sm:$0xf]
      %v923 = vld [vmem:[%s5 + $0xc] sm:$0xf]
      %v924 = vld [vmem:[%s5 + $0x10] sm:$0xf]
      %v925 = vld [vmem:[%s5 + $0x14] sm:$0xf]
      %v926 = vld [vmem:[%s5 + $0x18] sm:$0xf]
      %v927 = vld [vmem:[%s5 + $0x1c] sm:$0xf]
      %v928 = vld [vmem:[%s6] sm:$0x1]
      %v930 = vlaneseq
      %v931 = vshrl.u32 %v930, 7
      %v932 = vsub.s32 0, %v931
      %v933 = vrot.slane %v928, %v932
      %v943 = vunpack.c.l.b16 %v920
      %v944 = vunpack.c.l.b16 %v921
      %v945 = vunpack.c.l.b16 %v922
      %v946 = vunpack.c.l.b16 %v923
      %v947 = vunpack.c.l.b16 %v924
      %v948 = vunpack.c.l.b16 %v925
      %v949 = vunpack.c.l.b16 %v926
      %v950 = vunpack.c.l.b16 %v927
      %v951 = vpack.c.b16 %v944, %v943
      %v952 = vpack.c.b16 %v946, %v945
      %v953 = vpack.c.b16 %v948, %v947
      %v954 = vpack.c.b16 %v950, %v949
      %v960 = vsel %vm594, %v912, 0
      %v963 = vsel %vm594, %v913, 0
      %v966 = vsel %vm594, %v914, 0
      %v969 = vsel %vm594, %v915, 0
      %v972 = vsel %vm594, %v916, 0
      %v975 = vsel %vm594, %v917, 0
      %v978 = vsel %vm594, %v918, 0
      %v981 = vsel %vm594, %v919, 0
      %983 = vmatprep.subr.bf16.mxu0 0
      %984 = vmatpush1.bf16.msra.mxu0 0
      %985 = vmatprep.subr.bf16.mxu0 0
      %986 = vmatpush1.bf16.msra.mxu0 0
      %987 = vmatprep.subr.bf16.mxu0 0
      %988 = vmatpush1.bf16.msra.mxu0 0
      %989 = vmatprep.subr.bf16.mxu0 0
      %990 = vmatpush1.bf16.msra.mxu0 0
      %991 = vmatprep.subr.bf16.mxu0 0
      %992 = vmatpush1.bf16.msra.mxu0 %v954
      %993 = vmatprep.subr.bf16.mxu0 0
      %994 = vmatpush1.bf16.msra.mxu0 %v953
      %995 = vmatprep.subr.bf16.mxu0 0
      %996 = vmatpush1.bf16.msra.mxu0 %v952
      %997 = vmatprep.subr.bf16.mxu0 0
      %998 = vmatpush1.bf16.msra.mxu0 %v951
      %999 = vmatprep.subr.bf16.mxu0 0
      %1000 = vmatpush2.bf16.msra.mxu0 0
      %1001 = vmatprep.subr.bf16.mxu0 0
      %1002 = vmatpush2.bf16.msra.mxu0 0
      %1003 = vmatprep.subr.bf16.mxu0 0
      %1004 = vmatpush2.bf16.msra.mxu0 0
      %1005 = vmatprep.subr.bf16.mxu0 0
      %1006 = vmatpush2.bf16.msra.mxu0 0
      %1007 = vmatprep.subr.bf16.mxu0 0
      %1008 = vmatpush2.bf16.msra.mxu0 0
      %1009 = vmatprep.subr.bf16.mxu0 0
      %1010 = vmatpush2.bf16.msra.mxu0 0
      %1011 = vmatprep.subr.bf16.mxu0 0
      %1012 = vmatpush2.bf16.msra.mxu0 0
      %1013 = vmatprep.subr.bf16.mxu0 0
      %1014 = vmatpush2.bf16.msra.mxu0 0
      %1015 = vmatprep.mubr.bf16.mxu0 0
      %1016 = vmatmul.mubr.bf16.gmra.mxu0 %v960
      %v1017 = vpop.f32.mrf.mxu0
      %v1018 = vadd.f32 %v933, %v1017
      %v1019 = vpop.f32.mrf.mxu0
      %v1020 = vpop.f32.mrf.mxu0
      %v1021 = vadd.f32 %v933, %v1020
      %v1022 = vpop.f32.mrf.mxu0
      %1023 = vmatprep.mubr.bf16.mxu0 0
      %1024 = vmatmul.mubr.bf16.gmra.mxu0 %v963
      %v1025 = vpop.f32.mrf.mxu0
      %v1026 = vadd.f32 %v933, %v1025
      %v1027 = vpop.f32.mrf.mxu0
      %v1028 = vpop.f32.mrf.mxu0
      %v1029 = vadd.f32 %v933, %v1028
      %v1030 = vpop.f32.mrf.mxu0
      %1031 = vmatprep.mubr.bf16.mxu0 0
      %1032 = vmatmul.mubr.bf16.gmra.mxu0 %v966
      %v1033 = vpop.f32.mrf.mxu0
      %v1034 = vadd.f32 %v933, %v1033
      %v1035 = vpop.f32.mrf.mxu0
      %v1036 = vpop.f32.mrf.mxu0
      %v1037 = vadd.f32 %v933, %v1036
      %v1038 = vpop.f32.mrf.mxu0
      %1039 = vmatprep.mubr.bf16.mxu0 0
      %1040 = vmatmul.mubr.bf16.gmra.mxu0 %v969
      %v1041 = vpop.f32.mrf.mxu0
      %v1042 = vadd.f32 %v933, %v1041
      %v1043 = vpop.f32.mrf.mxu0
      %v1044 = vpop.f32.mrf.mxu0
      %v1045 = vadd.f32 %v933, %v1044
      %v1046 = vpop.f32.mrf.mxu0
      %1047 = vmatprep.mubr.bf16.mxu0 0
      %1048 = vmatmul.mubr.bf16.gmra.mxu0 %v972
      %v1049 = vpop.f32.mrf.mxu0
      %v1050 = vadd.f32 %v933, %v1049
      %v1051 = vpop.f32.mrf.mxu0
      %v1052 = vpop.f32.mrf.mxu0
      %v1053 = vadd.f32 %v933, %v1052
      %v1054 = vpop.f32.mrf.mxu0
      %1055 = vmatprep.mubr.bf16.mxu0 0
      %1056 = vmatmul.mubr.bf16.gmra.mxu0 %v975
      %v1057 = vpop.f32.mrf.mxu0
      %v1058 = vadd.f32 %v933, %v1057
      %v1059 = vpop.f32.mrf.mxu0
      %v1060 = vpop.f32.mrf.mxu0
      %v1061 = vadd.f32 %v933, %v1060
      %v1062 = vpop.f32.mrf.mxu0
      %1063 = vmatprep.mubr.bf16.mxu0 0
      %1064 = vmatmul.mubr.bf16.gmra.mxu0 %v978
      %v1065 = vpop.f32.mrf.mxu0
      %v1066 = vadd.f32 %v933, %v1065
      %v1067 = vpop.f32.mrf.mxu0
      %v1068 = vpop.f32.mrf.mxu0
      %v1069 = vadd.f32 %v933, %v1068
      %v1070 = vpop.f32.mrf.mxu0
      %1071 = vmatprep.mubr.bf16.mxu0 0
      %1072 = vmatmul.mubr.bf16.gmra.mxu0 %v981
      %v1073 = vpop.f32.mrf.mxu0
      %v1074 = vadd.f32 %v933, %v1073
      %v1075 = vpop.f32.mrf.mxu0
      %v1076 = vpop.f32.mrf.mxu0
      %v1077 = vadd.f32 %v933, %v1076
      %v1078 = vpop.f32.mrf.mxu0
      %1079 = vdwg.mxu0
      %v1080 = vld [vmem:[%s7] sm:$0x1]
      %v1081 = vld [vmem:[%s8] sm:$0x1]
      %v1082 = vsel %vm594, %v1018, 0.0
      %1083 = vadd.xlane.f32.xlu0 %v1082
      %v1084 = vpop.xlane.xlu0 %1083
      %v1085 = vsel %vm594, %v1021, 0.0
      %1086 = vadd.xlane.f32.xlu0 %v1085
      %v1087 = vpop.xlane.xlu0 %1086
      %v1088 = vsel %vm594, %v1026, 0.0
      %1089 = vadd.xlane.f32.xlu0 %v1088
      %v1090 = vpop.xlane.xlu0 %1089
      %v1091 = vsel %vm594, %v1029, 0.0
      %1092 = vadd.xlane.f32.xlu0 %v1091
      %v1093 = vpop.xlane.xlu0 %1092
      %v1094 = vsel %vm594, %v1034, 0.0
      %1095 = vadd.xlane.f32.xlu0 %v1094
      %v1096 = vpop.xlane.xlu0 %1095
      %v1097 = vsel %vm594, %v1037, 0.0
      %1098 = vadd.xlane.f32.xlu0 %v1097
      %v1099 = vpop.xlane.xlu0 %1098
      %v1100 = vsel %vm594, %v1042, 0.0
      %1101 = vadd.xlane.f32.xlu0 %v1100
      %v1102 = vpop.xlane.xlu0 %1101
      %v1103 = vsel %vm594, %v1045, 0.0
      %1104 = vadd.xlane.f32.xlu0 %v1103
      %v1105 = vpop.xlane.xlu0 %1104
      %v1106 = vsel %vm594, %v1050, 0.0
      %1107 = vadd.xlane.f32.xlu0 %v1106
      %v1108 = vpop.xlane.xlu0 %1107
      %v1109 = vsel %vm594, %v1053, 0.0
      %1110 = vadd.xlane.f32.xlu0 %v1109
      %v1111 = vpop.xlane.xlu0 %1110
      %v1112 = vsel %vm594, %v1058, 0.0
      %1113 = vadd.xlane.f32.xlu0 %v1112
      %v1114 = vpop.xlane.xlu0 %1113
      %v1115 = vsel %vm594, %v1061, 0.0
      %1116 = vadd.xlane.f32.xlu0 %v1115
      %v1117 = vpop.xlane.xlu0 %1116
      %v1118 = vsel %vm594, %v1066, 0.0
      %1119 = vadd.xlane.f32.xlu0 %v1118
      %v1120 = vpop.xlane.xlu0 %1119
      %v1121 = vsel %vm594, %v1069, 0.0
      %1122 = vadd.xlane.f32.xlu0 %v1121
      %v1123 = vpop.xlane.xlu0 %1122
      %v1124 = vsel %vm594, %v1074, 0.0
      %1125 = vadd.xlane.f32.xlu0 %v1124
      %v1126 = vpop.xlane.xlu0 %1125
      %v1127 = vsel %vm594, %v1077, 0.0
      %1128 = vadd.xlane.f32.xlu0 %v1127
      %v1129 = vpop.xlane.xlu0 %1128
      %v1130 = vmul.f32 %v1084, %v643
      %v1131 = vmul.f32 %v1087, %v643
      %v1132 = vmul.f32 %v1090, %v643
      %v1133 = vmul.f32 %v1093, %v643
      %v1134 = vmul.f32 %v1096, %v643
      %v1135 = vmul.f32 %v1099, %v643
      %v1136 = vmul.f32 %v1102, %v643
      %v1137 = vmul.f32 %v1105, %v643
      %v1138 = vmul.f32 %v1108, %v643
      %v1139 = vmul.f32 %v1111, %v643
      %v1140 = vmul.f32 %v1114, %v643
      %v1141 = vmul.f32 %v1117, %v643
      %v1142 = vmul.f32 %v1120, %v643
      %v1143 = vmul.f32 %v1123, %v643
      %v1144 = vmul.f32 %v1126, %v643
      %v1145 = vmul.f32 %v1129, %v643
      %v1146 = vmul.f32 %v1018, %v1018
      %v1147 = vmul.f32 %v1021, %v1021
      %v1148 = vmul.f32 %v1026, %v1026
      %v1149 = vmul.f32 %v1029, %v1029
      %v1150 = vmul.f32 %v1034, %v1034
      %v1151 = vmul.f32 %v1037, %v1037
      %v1152 = vmul.f32 %v1042, %v1042
      %v1153 = vmul.f32 %v1045, %v1045
      %v1154 = vmul.f32 %v1050, %v1050
      %v1155 = vmul.f32 %v1053, %v1053
      %v1156 = vmul.f32 %v1058, %v1058
      %v1157 = vmul.f32 %v1061, %v1061
      %v1158 = vmul.f32 %v1066, %v1066
      %v1159 = vmul.f32 %v1069, %v1069
      %v1160 = vmul.f32 %v1074, %v1074
      %v1161 = vmul.f32 %v1077, %v1077
      %v1162 = vsel %vm594, %v1146, 0.0
      %1163 = vadd.xlane.f32.xlu0 %v1162
      %v1164 = vpop.xlane.xlu0 %1163
      %v1165 = vsel %vm594, %v1147, 0.0
      %1166 = vadd.xlane.f32.xlu0 %v1165
      %v1167 = vpop.xlane.xlu0 %1166
      %v1168 = vsel %vm594, %v1148, 0.0
      %1169 = vadd.xlane.f32.xlu0 %v1168
      %v1170 = vpop.xlane.xlu0 %1169
      %v1171 = vsel %vm594, %v1149, 0.0
      %1172 = vadd.xlane.f32.xlu0 %v1171
      %v1173 = vpop.xlane.xlu0 %1172
      %v1174 = vsel %vm594, %v1150, 0.0
      %1175 = vadd.xlane.f32.xlu0 %v1174
      %v1176 = vpop.xlane.xlu0 %1175
      %v1177 = vsel %vm594, %v1151, 0.0
      %1178 = vadd.xlane.f32.xlu0 %v1177
      %v1179 = vpop.xlane.xlu0 %1178
      %v1180 = vsel %vm594, %v1152, 0.0
      %1181 = vadd.xlane.f32.xlu0 %v1180
      %v1182 = vpop.xlane.xlu0 %1181
      %v1183 = vsel %vm594, %v1153, 0.0
      %1184 = vadd.xlane.f32.xlu0 %v1183
      %v1185 = vpop.xlane.xlu0 %1184
      %v1186 = vsel %vm594, %v1154, 0.0
      %1187 = vadd.xlane.f32.xlu0 %v1186
      %v1188 = vpop.xlane.xlu0 %1187
      %v1189 = vsel %vm594, %v1155, 0.0
      %1190 = vadd.xlane.f32.xlu0 %v1189
      %v1191 = vpop.xlane.xlu0 %1190
      %v1192 = vsel %vm594, %v1156, 0.0
      %1193 = vadd.xlane.f32.xlu0 %v1192
      %v1194 = vpop.xlane.xlu0 %1193
      %v1195 = vsel %vm594, %v1157, 0.0
      %1196 = vadd.xlane.f32.xlu0 %v1195
      %v1197 = vpop.xlane.xlu0 %1196
      %v1198 = vsel %vm594, %v1158, 0.0
      %1199 = vadd.xlane.f32.xlu0 %v1198
      %v1200 = vpop.xlane.xlu0 %1199
      %v1201 = vsel %vm594, %v1159, 0.0
      %1202 = vadd.xlane.f32.xlu0 %v1201
      %v1203 = vpop.xlane.xlu0 %1202
      %v1204 = vsel %vm594, %v1160, 0.0
      %1205 = vadd.xlane.f32.xlu0 %v1204
      %v1206 = vpop.xlane.xlu0 %1205
      %v1207 = vsel %vm594, %v1161, 0.0
      %1208 = vadd.xlane.f32.xlu0 %v1207
      %v1209 = vpop.xlane.xlu0 %1208
      %v1210 = vmul.f32 %v1164, %v643
      %v1211 = vmul.f32 %v1167, %v643
      %v1212 = vmul.f32 %v1170, %v643
      %v1213 = vmul.f32 %v1173, %v643
      %v1214 = vmul.f32 %v1176, %v643
      %v1215 = vmul.f32 %v1179, %v643
      %v1216 = vmul.f32 %v1182, %v643
      %v1217 = vmul.f32 %v1185, %v643
      %v1218 = vmul.f32 %v1188, %v643
      %v1219 = vmul.f32 %v1191, %v643
      %v1220 = vmul.f32 %v1194, %v643
      %v1221 = vmul.f32 %v1197, %v643
      %v1222 = vmul.f32 %v1200, %v643
      %v1223 = vmul.f32 %v1203, %v643
      %v1224 = vmul.f32 %v1206, %v643
      %v1225 = vmul.f32 %v1209, %v643
      %v1226 = vmul.f32 %v1130, %v1130
      %v1227 = vmul.f32 %v1131, %v1131
      %v1228 = vmul.f32 %v1132, %v1132
      %v1229 = vmul.f32 %v1133, %v1133
      %v1230 = vmul.f32 %v1134, %v1134
      %v1231 = vmul.f32 %v1135, %v1135
      %v1232 = vmul.f32 %v1136, %v1136
      %v1233 = vmul.f32 %v1137, %v1137
      %v1234 = vmul.f32 %v1138, %v1138
      %v1235 = vmul.f32 %v1139, %v1139
      %v1236 = vmul.f32 %v1140, %v1140
      %v1237 = vmul.f32 %v1141, %v1141
      %v1238 = vmul.f32 %v1142, %v1142
      %v1239 = vmul.f32 %v1143, %v1143
      %v1240 = vmul.f32 %v1144, %v1144
      %v1241 = vmul.f32 %v1145, %v1145
      %v1242 = vsub.f32 %v1210, %v1226
      %v1243 = vsub.f32 %v1211, %v1227
      %v1244 = vsub.f32 %v1212, %v1228
      %v1245 = vsub.f32 %v1213, %v1229
      %v1246 = vsub.f32 %v1214, %v1230
      %v1247 = vsub.f32 %v1215, %v1231
      %v1248 = vsub.f32 %v1216, %v1232
      %v1249 = vsub.f32 %v1217, %v1233
      %v1250 = vsub.f32 %v1218, %v1234
      %v1251 = vsub.f32 %v1219, %v1235
      %v1252 = vsub.f32 %v1220, %v1236
      %v1253 = vsub.f32 %v1221, %v1237
      %v1254 = vsub.f32 %v1222, %v1238
      %v1255 = vsub.f32 %v1223, %v1239
      %v1256 = vsub.f32 %v1224, %v1240
      %v1257 = vsub.f32 %v1225, %v1241
      %v1258 = vmax.f32 %v1242, 0.0
      %v1259 = vmax.f32 %v1243, 0.0
      %v1260 = vmax.f32 %v1244, 0.0
      %v1261 = vmax.f32 %v1245, 0.0
      %v1262 = vmax.f32 %v1246, 0.0
      %v1263 = vmax.f32 %v1247, 0.0
      %v1264 = vmax.f32 %v1248, 0.0
      %v1265 = vmax.f32 %v1249, 0.0
      %v1266 = vmax.f32 %v1250, 0.0
      %v1267 = vmax.f32 %v1251, 0.0
      %v1268 = vmax.f32 %v1252, 0.0
      %v1269 = vmax.f32 %v1253, 0.0
      %v1270 = vmax.f32 %v1254, 0.0
      %v1271 = vmax.f32 %v1255, 0.0
      %v1272 = vmax.f32 %v1256, 0.0
      %v1273 = vmax.f32 %v1257, 0.0
      %v1274 = vsub.f32 %v1018, %v1130
      %v1275 = vsub.f32 %v1021, %v1131
      %v1276 = vsub.f32 %v1026, %v1132
      %v1277 = vsub.f32 %v1029, %v1133
      %v1278 = vsub.f32 %v1034, %v1134
      %v1279 = vsub.f32 %v1037, %v1135
      %v1280 = vsub.f32 %v1042, %v1136
      %v1281 = vsub.f32 %v1045, %v1137
      %v1282 = vsub.f32 %v1050, %v1138
      %v1283 = vsub.f32 %v1053, %v1139
      %v1284 = vsub.f32 %v1058, %v1140
      %v1285 = vsub.f32 %v1061, %v1141
      %v1286 = vsub.f32 %v1066, %v1142
      %v1287 = vsub.f32 %v1069, %v1143
      %v1288 = vsub.f32 %v1074, %v1144
      %v1289 = vsub.f32 %v1077, %v1145
      %v1290 = vadd.f32 %v1258, 1e-05
      %v1291 = vadd.f32 %v1259, 1e-05
      %v1292 = vadd.f32 %v1260, 1e-05
      %v1293 = vadd.f32 %v1261, 1e-05
      %v1294 = vadd.f32 %v1262, 1e-05
      %v1295 = vadd.f32 %v1263, 1e-05
      %v1296 = vadd.f32 %v1264, 1e-05
      %v1297 = vadd.f32 %v1265, 1e-05
      %v1298 = vadd.f32 %v1266, 1e-05
      %v1299 = vadd.f32 %v1267, 1e-05
      %v1300 = vadd.f32 %v1268, 1e-05
      %v1301 = vadd.f32 %v1269, 1e-05
      %v1302 = vadd.f32 %v1270, 1e-05
      %v1303 = vadd.f32 %v1271, 1e-05
      %v1304 = vadd.f32 %v1272, 1e-05
      %v1305 = vadd.f32 %v1273, 1e-05
      %v1306 = vrsqrt.pop %v1290
      %v1307 = vrsqrt.pop %v1291
      %v1308 = vrsqrt.pop %v1292
      %v1309 = vrsqrt.pop %v1293
      %v1310 = vrsqrt.pop %v1294
      %v1311 = vrsqrt.pop %v1295
      %v1312 = vrsqrt.pop %v1296
      %v1313 = vrsqrt.pop %v1297
      %v1314 = vrsqrt.pop %v1298
      %v1315 = vrsqrt.pop %v1299
      %v1316 = vrsqrt.pop %v1300
      %v1317 = vrsqrt.pop %v1301
      %v1318 = vrsqrt.pop %v1302
      %v1319 = vrsqrt.pop %v1303
      %v1320 = vrsqrt.pop %v1304
      %v1321 = vrsqrt.pop %v1305
      %v1322 = vmul.f32 %v1274, %v1306
      %v1323 = vmul.f32 %v1275, %v1307
      %v1324 = vmul.f32 %v1276, %v1308
      %v1325 = vmul.f32 %v1277, %v1309
      %v1326 = vmul.f32 %v1278, %v1310
      %v1327 = vmul.f32 %v1279, %v1311
      %v1328 = vmul.f32 %v1280, %v1312
      %v1329 = vmul.f32 %v1281, %v1313
      %v1330 = vmul.f32 %v1282, %v1314
      %v1331 = vmul.f32 %v1283, %v1315
      %v1332 = vmul.f32 %v1284, %v1316
      %v1333 = vmul.f32 %v1285, %v1317
      %v1334 = vmul.f32 %v1286, %v1318
      %v1335 = vmul.f32 %v1287, %v1319
      %v1336 = vmul.f32 %v1288, %v1320
      %v1337 = vmul.f32 %v1289, %v1321
      %v1339 = vlaneseq
      %v1340 = vshrl.u32 %v1339, 7
      %v1341 = vsub.s32 0, %v1340
      %v1342 = vrot.slane %v1080, %v1341
      %v1344 = vmul.f32 %v1322, %v1342
      %v1345 = vmul.f32 %v1323, %v1342
      %v1346 = vmul.f32 %v1324, %v1342
      %v1347 = vmul.f32 %v1325, %v1342
      %v1348 = vmul.f32 %v1326, %v1342
      %v1349 = vmul.f32 %v1327, %v1342
      %v1350 = vmul.f32 %v1328, %v1342
      %v1351 = vmul.f32 %v1329, %v1342
      %v1352 = vmul.f32 %v1330, %v1342
      %v1353 = vmul.f32 %v1331, %v1342
      %v1354 = vmul.f32 %v1332, %v1342
      %v1355 = vmul.f32 %v1333, %v1342
      %v1356 = vmul.f32 %v1334, %v1342
      %v1357 = vmul.f32 %v1335, %v1342
      %v1358 = vmul.f32 %v1336, %v1342
      %v1359 = vmul.f32 %v1337, %v1342
      %v1361 = vlaneseq
      %v1362 = vshrl.u32 %v1361, 7
      %v1363 = vsub.s32 0, %v1362
      %v1364 = vrot.slane %v1081, %v1363
      %v1366 = vadd.f32 %v1344, %v1364
      %v1367 = vadd.f32 %v1345, %v1364
      %v1368 = vadd.f32 %v1346, %v1364
      %v1369 = vadd.f32 %v1347, %v1364
      %v1370 = vadd.f32 %v1348, %v1364
      %v1371 = vadd.f32 %v1349, %v1364
      %v1372 = vadd.f32 %v1350, %v1364
      %v1373 = vadd.f32 %v1351, %v1364
      %v1374 = vadd.f32 %v1352, %v1364
      %v1375 = vadd.f32 %v1353, %v1364
      %v1376 = vadd.f32 %v1354, %v1364
      %v1377 = vadd.f32 %v1355, %v1364
      %v1378 = vadd.f32 %v1356, %v1364
      %v1379 = vadd.f32 %v1357, %v1364
      %v1380 = vadd.f32 %v1358, %v1364
      %v1381 = vadd.f32 %v1359, %v1364
      %v1382 = vmax.f32 %v1366, 0.0
      %v1383 = vmax.f32 %v1367, 0.0
      %v1384 = vmax.f32 %v1368, 0.0
      %v1385 = vmax.f32 %v1369, 0.0
      %v1386 = vmax.f32 %v1370, 0.0
      %v1387 = vmax.f32 %v1371, 0.0
      %v1388 = vmax.f32 %v1372, 0.0
      %v1389 = vmax.f32 %v1373, 0.0
      %v1390 = vmax.f32 %v1374, 0.0
      %v1391 = vmax.f32 %v1375, 0.0
      %v1392 = vmax.f32 %v1376, 0.0
      %v1393 = vmax.f32 %v1377, 0.0
      %v1394 = vmax.f32 %v1378, 0.0
      %v1395 = vmax.f32 %v1379, 0.0
      %v1396 = vmax.f32 %v1380, 0.0
      %v1397 = vmax.f32 %v1381, 0.0
      %v1398 = vpack.c.bf16 %v1383, %v1382
      %v1399 = vpack.c.bf16 %v1385, %v1384
      %v1400 = vpack.c.bf16 %v1387, %v1386
      %v1401 = vpack.c.bf16 %v1389, %v1388
      %v1402 = vpack.c.bf16 %v1391, %v1390
      %v1403 = vpack.c.bf16 %v1393, %v1392
      %v1404 = vpack.c.bf16 %v1395, %v1394
      %v1405 = vpack.c.bf16 %v1397, %v1396
      %v1406 = vld [vmem:[%s9] sm:$0xf]
      %v1407 = vld [vmem:[%s9 + $0x4] sm:$0xf]
      %v1408 = vld [vmem:[%s9 + $0x8] sm:$0xf]
      %v1409 = vld [vmem:[%s9 + $0xc] sm:$0xf]
      %v1410 = vld [vmem:[%s9 + $0x10] sm:$0xf]
      %v1411 = vld [vmem:[%s9 + $0x14] sm:$0xf]
      %v1412 = vld [vmem:[%s9 + $0x18] sm:$0xf]
      %v1413 = vld [vmem:[%s9 + $0x1c] sm:$0xf]
      %v1414 = vld [vmem:[%s10] sm:$0x1]
      %v1416 = vlaneseq
      %v1417 = vshrl.u32 %v1416, 7
      %v1418 = vsub.s32 0, %v1417
      %v1419 = vrot.slane %v1414, %v1418
      %v1429 = vunpack.c.l.b16 %v1406
      %v1430 = vunpack.c.l.b16 %v1407
      %v1431 = vunpack.c.l.b16 %v1408
      %v1432 = vunpack.c.l.b16 %v1409
      %v1433 = vunpack.c.l.b16 %v1410
      %v1434 = vunpack.c.l.b16 %v1411
      %v1435 = vunpack.c.l.b16 %v1412
      %v1436 = vunpack.c.l.b16 %v1413
      %v1437 = vpack.c.b16 %v1430, %v1429
      %v1438 = vpack.c.b16 %v1432, %v1431
      %v1439 = vpack.c.b16 %v1434, %v1433
      %v1440 = vpack.c.b16 %v1436, %v1435
      %v1446 = vsel %vm594, %v1398, 0
      %v1449 = vsel %vm594, %v1399, 0
      %v1452 = vsel %vm594, %v1400, 0
      %v1455 = vsel %vm594, %v1401, 0
      %v1458 = vsel %vm594, %v1402, 0
      %v1461 = vsel %vm594, %v1403, 0
      %v1464 = vsel %vm594, %v1404, 0
      %v1467 = vsel %vm594, %v1405, 0
      %1469 = vmatprep.subr.bf16.mxu0 0
      %1470 = vmatpush1.bf16.msra.mxu0 0
      %1471 = vmatprep.subr.bf16.mxu0 0
      %1472 = vmatpush1.bf16.msra.mxu0 0
      %1473 = vmatprep.subr.bf16.mxu0 0
      %1474 = vmatpush1.bf16.msra.mxu0 0
      %1475 = vmatprep.subr.bf16.mxu0 0
      %1476 = vmatpush1.bf16.msra.mxu0 0
      %1477 = vmatprep.subr.bf16.mxu0 0
      %1478 = vmatpush1.bf16.msra.mxu0 %v1440
      %1479 = vmatprep.subr.bf16.mxu0 0
      %1480 = vmatpush1.bf16.msra.mxu0 %v1439
      %1481 = vmatprep.subr.bf16.mxu0 0
      %1482 = vmatpush1.bf16.msra.mxu0 %v1438
      %1483 = vmatprep.subr.bf16.mxu0 0
      %1484 = vmatpush1.bf16.msra.mxu0 %v1437
      %1485 = vmatprep.subr.bf16.mxu0 0
      %1486 = vmatpush2.bf16.msra.mxu0 0
      %1487 = vmatprep.subr.bf16.mxu0 0
      %1488 = vmatpush2.bf16.msra.mxu0 0
      %1489 = vmatprep.subr.bf16.mxu0 0
      %1490 = vmatpush2.bf16.msra.mxu0 0
      %1491 = vmatprep.subr.bf16.mxu0 0
      %1492 = vmatpush2.bf16.msra.mxu0 0
      %1493 = vmatprep.subr.bf16.mxu0 0
      %1494 = vmatpush2.bf16.msra.mxu0 0
      %1495 = vmatprep.subr.bf16.mxu0 0
      %1496 = vmatpush2.bf16.msra.mxu0 0
      %1497 = vmatprep.subr.bf16.mxu0 0
      %1498 = vmatpush2.bf16.msra.mxu0 0
      %1499 = vmatprep.subr.bf16.mxu0 0
      %1500 = vmatpush2.bf16.msra.mxu0 0
      %1501 = vmatprep.mubr.bf16.mxu0 0
      %1502 = vmatmul.mubr.bf16.gmra.mxu0 %v1446
      %v1503 = vpop.f32.mrf.mxu0
      %v1504 = vadd.f32 %v1419, %v1503
      %v1505 = vpop.f32.mrf.mxu0
      %v1506 = vpop.f32.mrf.mxu0
      %v1507 = vadd.f32 %v1419, %v1506
      %v1508 = vpop.f32.mrf.mxu0
      %1509 = vmatprep.mubr.bf16.mxu0 0
      %1510 = vmatmul.mubr.bf16.gmra.mxu0 %v1449
      %v1511 = vpop.f32.mrf.mxu0
      %v1512 = vadd.f32 %v1419, %v1511
      %v1513 = vpop.f32.mrf.mxu0
      %v1514 = vpop.f32.mrf.mxu0
      %v1515 = vadd.f32 %v1419, %v1514
      %v1516 = vpop.f32.mrf.mxu0
      %1517 = vmatprep.mubr.bf16.mxu0 0
      %1518 = vmatmul.mubr.bf16.gmra.mxu0 %v1452
      %v1519 = vpop.f32.mrf.mxu0
      %v1520 = vadd.f32 %v1419, %v1519
      %v1521 = vpop.f32.mrf.mxu0
      %v1522 = vpop.f32.mrf.mxu0
      %v1523 = vadd.f32 %v1419, %v1522
      %v1524 = vpop.f32.mrf.mxu0
      %1525 = vmatprep.mubr.bf16.mxu0 0
      %1526 = vmatmul.mubr.bf16.gmra.mxu0 %v1455
      %v1527 = vpop.f32.mrf.mxu0
      %v1528 = vadd.f32 %v1419, %v1527
      %v1529 = vpop.f32.mrf.mxu0
      %v1530 = vpop.f32.mrf.mxu0
      %v1531 = vadd.f32 %v1419, %v1530
      %v1532 = vpop.f32.mrf.mxu0
      %1533 = vmatprep.mubr.bf16.mxu0 0
      %1534 = vmatmul.mubr.bf16.gmra.mxu0 %v1458
      %v1535 = vpop.f32.mrf.mxu0
      %v1536 = vadd.f32 %v1419, %v1535
      %v1537 = vpop.f32.mrf.mxu0
      %v1538 = vpop.f32.mrf.mxu0
      %v1539 = vadd.f32 %v1419, %v1538
      %v1540 = vpop.f32.mrf.mxu0
      %1541 = vmatprep.mubr.bf16.mxu0 0
      %1542 = vmatmul.mubr.bf16.gmra.mxu0 %v1461
      %v1543 = vpop.f32.mrf.mxu0
      %v1544 = vadd.f32 %v1419, %v1543
      %v1545 = vpop.f32.mrf.mxu0
      %v1546 = vpop.f32.mrf.mxu0
      %v1547 = vadd.f32 %v1419, %v1546
      %v1548 = vpop.f32.mrf.mxu0
      %1549 = vmatprep.mubr.bf16.mxu0 0
      %1550 = vmatmul.mubr.bf16.gmra.mxu0 %v1464
      %v1551 = vpop.f32.mrf.mxu0
      %v1552 = vadd.f32 %v1419, %v1551
      %v1553 = vpop.f32.mrf.mxu0
      %v1554 = vpop.f32.mrf.mxu0
      %v1555 = vadd.f32 %v1419, %v1554
      %v1556 = vpop.f32.mrf.mxu0
      %1557 = vmatprep.mubr.bf16.mxu0 0
      %1558 = vmatmul.mubr.bf16.gmra.mxu0 %v1467
      %v1559 = vpop.f32.mrf.mxu0
      %v1560 = vadd.f32 %v1419, %v1559
      %v1561 = vpop.f32.mrf.mxu0
      %v1562 = vpop.f32.mrf.mxu0
      %v1563 = vadd.f32 %v1419, %v1562
      %v1564 = vpop.f32.mrf.mxu0
      %1565 = vdwg.mxu0
      %1566 = vst [vmem:[%s388] sm:$0xff] %v1504
      %1567 = vst [vmem:[%s388 + $0x8] sm:$0xff] %v1507
      %1568 = vst [vmem:[%s388 + $0x10] sm:$0xff] %v1512
      %1569 = vst [vmem:[%s388 + $0x18] sm:$0xff] %v1515
      %1570 = vst [vmem:[%s388 + $0x20] sm:$0xff] %v1520
      %1571 = vst [vmem:[%s388 + $0x28] sm:$0xff] %v1523
      %1572 = vst [vmem:[%s388 + $0x30] sm:$0xff] %v1528
      %1573 = vst [vmem:[%s388 + $0x38] sm:$0xff] %v1531
      %1574 = vst [vmem:[%s388 + $0x40] sm:$0xff] %v1536
      %1575 = vst [vmem:[%s388 + $0x48] sm:$0xff] %v1539
      %1576 = vst [vmem:[%s388 + $0x50] sm:$0xff] %v1544
      %1577 = vst [vmem:[%s388 + $0x58] sm:$0xff] %v1547
      %1578 = vst [vmem:[%s388 + $0x60] sm:$0xff] %v1552
      %1579 = vst [vmem:[%s388 + $0x68] sm:$0xff] %v1555
      %1580 = vst [vmem:[%s388 + $0x70] sm:$0xff] %v1560
      %1581 = vst [vmem:[%s388 + $0x78] sm:$0xff] %v1563
      %s1582 = smul.u32 16, %s22
      %p1583 = scmp.lt.s32.totalorder %s1582, 31
      %s1584 = scalar_select %p1583, %s1582, 31
      %s1585 = smul.addr %s1584, 8
      %s1586 = scalar_lea.vmem %s11, %s1585
      // Predicated region
      $region65: #{mymodel_forward.1} parent=63 // pred_check
        %p1587 = pneg %p276
      $region66: #{mymodel_forward.1} parent=63 // pred_check_branch
        %1589 = sbr.rel (%p1587) target = $region68
      $region67: #{mymodel_forward.1} parent=63 // pred_region
        %s1590 = smul.u32 16, %s22
      $region68: #{mymodel_forward.1} parent=63 // pred_fallthru
        _
    $region64: #{mymodel_forward.1} parent=5 // pred_fallthru
      _
    %p1591 = scmp.le.s32.totalorder 2, %s17
    // Predicated region
    $region69: #{mymodel_forward.1} parent=5 // pred_check
      %p1592 = pneg %p1591
    $region70: #{mymodel_forward.1} parent=5 // pred_check_branch
      %1594 = sbr.rel (%p1592) target = $region72
    $region71: #{mymodel_forward.1} parent=5 // pred_region
      %s1595 = ssub.s32 %s17, 2
      // Predicated region
      $region73: #{mymodel_forward.1} parent=71 // pred_check
        %p1596 = pneg %p282
      $region74: #{mymodel_forward.1} parent=71 // pred_check_branch
        %1598 = sbr.rel (%p1596) target = $region76
      $region75: #{mymodel_forward.1} parent=71 // pred_region
        %s1599 = smul.u32 16, %s23
        %p1600 = scmp.lt.s32.totalorder %s1599, 31
        %s1601 = scalar_select %p1600, %s1599, 31
        %s1602 = smul.addr %s1601, 8
        %s1603 = scalar_lea.vmem %s11, %s1602
      $region76: #{mymodel_forward.1} parent=71 // pred_fallthru
        _
    $region72: #{mymodel_forward.1} parent=5 // pred_fallthru
      _
  $region6: #{mymodel_forward.1} parent=0 // loop_footer
    %s21 = sadd.s32 1, %s17
  $region7: #{mymodel_forward.1} parent=0 // loop_footer_branch
    %16 = sbr.rel target = $region3
  $region8: #{mymodel_forward.1} parent=0 // loop_exit
    _

</llo_original>
